<compile_context>
chip_gen: v6e
topology: v6e:2x2x1
jax: 0.10.0
libtpu: 0.0.40
codegen_flags: <defaults>
</compile_context>

<pallas_src>
import functools

import jax
import jax.numpy as jnp
from jax.experimental import pallas as pl
from jax.experimental.pallas import tpu as pltpu


def _elu_plus_one(x):
    # F.elu(x, alpha=1) + 1  ==  x + 1 (x > 0) else exp(x)   (kept in f32)
    return jnp.where(x > 0, x + 1.0, jnp.exp(jnp.minimum(x, 0.0)))


def mha_kernel(q_ref, k_ref, v_ref,
               wq_ref, bq_ref, wk_ref, bk_ref, wv_ref, bv_ref,
               wm_ref, bm_ref, o_ref, *, num_heads, lk_valid, eps):
    """One (batch-block, Lq-tile) grid step, all in Conv1d NCL layout.

    q_ref: (bb, C, Tq) bf16, k_ref/v_ref: (bb, C, Lk) bf16,
    weights: (C, C) bf16, biases: (C, 1) f32, o_ref: (bb, C, Tq) out dtype.
    """
    f32, bf16 = jnp.float32, jnp.bfloat16
    bb, C, _ = q_ref.shape
    Lk = k_ref.shape[2]
    depth = C // num_heads

    # Constant operands: constant index maps -> fetched once per step by the pipeline.
    wq = wq_ref[...]; wk = wk_ref[...]; wv = wv_ref[...]; wm = wm_ref[...]
    bq = bq_ref[...]; bk = bk_ref[...]; bv = bv_ref[...]; bm = bm_ref[...]

    # Same-head boolean mask (torch .view(B, dim, H, L): channel c -> head c % H).
    # Built in-kernel from iota: no HBM traffic; only the bool stays live.
    row_h = jax.lax.broadcasted_iota(jnp.int32, (C, C), 0) % num_heads
    col_h = jax.lax.broadcasted_iota(jnp.int32, (C, C), 1) % num_heads
    same_head = row_h == col_h

    # Key-column validity mask, only materialized if Lk was lane-padded.
    if lk_valid < Lk:
        k_keep = jax.lax.broadcasted_iota(jnp.int32, (C, Lk), 1) < lk_valid
    else:
        k_keep = None

    use_roll = depth > 0 and (depth & (depth - 1)) == 0

    def body(i, carry):
        q = q_ref[i]                                   # bf16 (C, Tq)
        k = k_ref[i]                                   # bf16 (C, Lk)
        v = v_ref[i]                                   # bf16 (C, Lk)

        # 1x1 convs in NCL layout: W @ x + bias column (bf16 MXU, f32 accumulate).
        Qn = jnp.dot(wq, q, preferred_element_type=f32) + bq     # (C, Tq)
        Kn = jnp.dot(wk, k, preferred_element_type=f32) + bk     # (C, Lk)
        Vn = jnp.dot(wv, v, preferred_element_type=f32) + bv     # (C, Lk)

        Qp = _elu_plus_one(Qn)                                   # f32
        Kp = _elu_plus_one(Kn)                                   # f32
        if k_keep is not None:
            Kp = jnp.where(k_keep, Kp, 0.0)   # zero padded key columns -> KV/ksum exact
        # NOTE: the reference's value/v_length ... * v_length cancels exactly,
        # so V is used unscaled.

        # KV[cv, ck] = sum_m Vn[cv, m] * Kp[ck, m], same-head pairs only.
        KV = jax.lax.dot_general(
            Vn.astype(bf16), Kp.astype(bf16),
            (((1,), (1,)), ((), ())), preferred_element_type=f32)
        KV = jnp.where(same_head, KV, 0.0)                       # (C, C)

        # denom[c, m] = sum_{c' in head(c)} Qp[c', m] * sum_m' Kp[c', m'].
        ksum = jnp.sum(Kp, axis=1, keepdims=True)                # (C, 1)
        y = ksum * Qp                                            # (C, Tq) f32
        if use_roll:
            # Per-head reduction via log2(D) circular sublane roll-and-adds
            # (XLU slot; replaces a full CxCxTq MXU matmul).  Rolling by
            # multiples of H keeps head identity, so after D-fold doubling
            # every channel holds its head's sum.
            s = num_heads
            while s < C:
                y = y + pltpu.roll(y, shift=s, axis=0)
                s *= 2
            denom = y + eps
        else:
            # TODO(synk): non-power-of-two head depth -> masked-matmul fallback.
            mask_bf = jnp.where(same_head, 1.0, 0.0).astype(bf16)
            denom = jnp.dot(mask_bf, y.astype(bf16),
                            preferred_element_type=f32) + eps
        Z = pl.reciprocal(denom, approx=False)                   # exact; EUP has slack

        # Queried values (channel-major, identical to torch's view-back).
        X = jnp.dot(KV.astype(bf16), Qp.astype(bf16),
                    preferred_element_type=f32) * Z              # (C, Tq)

        # Merge 1x1 conv -> output written directly in NCL layout (lane-dense).
        Y = jnp.dot(wm, X.astype(bf16), preferred_element_type=f32) + bm
        o_ref[i] = Y.astype(o_ref.dtype)
        return carry

    if bb <= 2:
        for i in range(bb):                       # short static unroll is fine
            body(i, None)
    else:
        jax.lax.fori_loop(0, bb, body, None)      # bounds live ranges to one element


def _tpu_vmem_bytes():
    """(vmem_capacity_bytes, detected) with a conservative fallback."""
    try:
        return int(pltpu.get_tpu_info().vmem_capacity_bytes), True
    except Exception:
        return 64 * 1024 * 1024, False


def _round_up(x, m):
    return ((x + m - 1) // m) * m


def _pick_batch_block(batch, C, Lq, Lk, vmem_bytes, out_itemsize, max_block=16):
    """Largest divisor of `batch` whose double-buffered working set fits the VMEM
    budget, keeping >= 2 grid steps when batch >= 2 (so both v7x TensorCores get
    work), capped at `max_block`."""
    per_b = 2 * 2 * C * (Lq + 2 * Lk) + 2 * out_itemsize * C * Lq   # bf16 in + out, x2 bufs
    const_bytes = 2 * (4 * C * C * 2 + 4 * C * 128 * 4)             # weights + padded biases
    inter = (8 * C * Lq + 5 * C * Lk + 3 * C * C) * 4               # one loop iteration (f32)
    budget = int(vmem_bytes * 0.70) - const_bytes - inter
    max_bb = max(1, budget // max(per_b, 1))
    best = 1
    for bb in range(1, min(batch, max_block) + 1):
        if batch % bb:
            continue
        if bb > max_bb:
            continue
        if batch >= 2 and batch // bb < 2:
            continue
        best = bb
    return best


@functools.partial(jax.jit, static_argnames=("num_heads",))
def multi_headed_attention(query, key, value, params, num_heads):
    """query/key/value in PyTorch Conv1d layout (B, d_model, L); output ditto."""
    B, C, Lq = query.shape
    Lk = key.shape[2]
    assert C % num_heads == 0

    (wq, bq), (wk, bk), (wv, bv) = params["proj0"], params["proj1"], params["proj2"]
    wm, bm = params["merge"]

    bf16, f32 = jnp.bfloat16, jnp.float32
    out_dtype = query.dtype

    # Lane-dense padding: last dims to multiples of 128.  Padded key columns are
    # masked in-kernel; padded query columns are sliced off below.
    Lq_pad = max(_round_up(Lq, 128), 128)
    Lk_pad = max(_round_up(Lk, 128), 128)

    def prep(x, L_pad):
        x = x.astype(bf16)                         # bf16 at the boundary: half the DMA bytes
        pad = L_pad - x.shape[2]
        if pad:
            x = jnp.pad(x, ((0, 0), (0, 0), (0, pad)))
        return x

    q_in = prep(query, Lq_pad)
    k_in = prep(key, Lk_pad)
    v_in = prep(value, Lk_pad)

    # Torch Conv1d weights are (C_out, C_in) -- exactly what the NCL matmul wants
    # on the LHS.  bf16 weights (MXU-native), f32 (C, 1) bias columns.
    wq_k, wk_k, wv_k, wm_k = (w.astype(bf16) for w in (wq, wk, wv, wm))
    bq_k, bk_k, bv_k, bm_k = (b.astype(f32)[:, None] for b in (bq, bk, bv, bm))

    vmem_bytes, vmem_detected = _tpu_vmem_bytes()
    bb = _pick_batch_block(B, C, Lq_pad, Lk_pad, vmem_bytes,
                           jnp.dtype(out_dtype).itemsize)
    b_steps = B // bb

    # Lq 'parallel' split only when a 2-TC chip (v7x, 64 MiB VMEM proxy) would
    # otherwise idle one TensorCore; never taken on v5e/v6e (128 MiB, single TC).
    two_tc = vmem_detected and vmem_bytes <= 64 * 1024 * 1024
    lq_tiles = 2 if (two_tc and b_steps < 2 and Lq_pad % 256 == 0) else 1
    Tq = Lq_pad // lq_tiles

    grid = (b_steps, lq_tiles)
    kernel = functools.partial(mha_kernel, num_heads=num_heads,
                               lk_valid=Lk, eps=1e-6)

    # Constant index maps -> single fetch per block by the pipeline.
    # (On v7x these could additionally be single-buffered via pipeline_mode=pl.Buffered(1).)
    wspec = pl.BlockSpec((C, C), lambda b, t: (0, 0))
    bspec = pl.BlockSpec((C, 1), lambda b, t: (0, 0))

    out = pl.pallas_call(
        kernel,
        out_shape=jax.ShapeDtypeStruct((B, C, Lq_pad), out_dtype),
        grid=grid,
        in_specs=[
            pl.BlockSpec((bb, C, Tq), lambda b, t: (b, 0, t)),        # q (NCL, bf16)
            pl.BlockSpec((bb, C, Lk_pad), lambda b, t: (b, 0, 0)),    # k
            pl.BlockSpec((bb, C, Lk_pad), lambda b, t: (b, 0, 0)),    # v
            wspec, bspec,                                             # proj q
            wspec, bspec,                                             # proj k
            wspec, bspec,                                             # proj v
            wspec, bspec,                                             # merge
        ],
        out_specs=pl.BlockSpec((bb, C, Tq), lambda b, t: (b, 0, t)),
        compiler_params=pltpu.CompilerParams(
            dimension_semantics=("parallel", "parallel"),
            vmem_limit_bytes=min(int(vmem_bytes) * 3 // 4, 100 * 1024 * 1024),
        ),
    )(q_in, k_in, v_in,
      wq_k, bq_k, wk_k, bk_k, wv_k, bv_k, wm_k, bm_k)

    if Lq_pad != Lq:
        out = out[:, :, :Lq]
    return out


def reference_forward(query, key, value, params, num_heads):
    """Pure-JAX mirror of the PyTorch module (for verification only)."""
    B, C, _ = query.shape
    D = C // num_heads
    hp = jax.lax.Precision.HIGHEST

    def conv1x1(x, wb):
        w, b = wb
        return jnp.einsum('oc,bcl->bol', w, x, precision=hp) + b[None, :, None]

    q = conv1x1(query, params["proj0"]).reshape(B, D, num_heads, -1)
    k = conv1x1(key, params["proj1"]).reshape(B, D, num_heads, -1)
    v = conv1x1(value, params["proj2"]).reshape(B, D, num_heads, -1)

    eps = 1e-6
    q = jax.nn.elu(q) + 1.0
    k = jax.nn.elu(k) + 1.0
    vlen = v.shape[3]
    v = v / vlen
    KV = jnp.einsum('bdhm,bqhm->bqdh', k, v, precision=hp)
    Z = 1.0 / (jnp.einsum('bdhm,bdh->bhm', q, k.sum(3), precision=hp) + eps)
    out = jnp.einsum('bdhm,bqdh,bhm->bqhm', q, KV, Z, precision=hp) * vlen
    x = out.reshape(B, D * num_heads, -1)
    return conv1x1(x, params["merge"])


if __name__ == "__main__":
    B, d_model, num_heads = 2, 32, 4
    Lq, Lk = 16, 24

    root = jax.random.PRNGKey(0)
    ks = jax.random.split(root, 11)

    def mk_conv(kw, kb):
        # Conv1d(d_model, d_model, kernel_size=1) -> weight (C_out, C_in), bias (C_out,)
        w = 0.1 * jax.random.normal(kw, (d_model, d_model), jnp.float32)
        b = 0.1 * jax.random.normal(kb, (d_model,), jnp.float32)
        return w, b

    params = {
        "proj0": mk_conv(ks[0], ks[1]),
        "proj1": mk_conv(ks[2], ks[3]),
        "proj2": mk_conv(ks[4], ks[5]),
        "merge": mk_conv(ks[6], ks[7]),
    }

    query = jax.random.normal(ks[8], (B, d_model, Lq), jnp.float32)
    key_in = jax.random.normal(ks[9], (B, d_model, Lk), jnp.float32)
    value = jax.random.normal(ks[10], (B, d_model, Lk), jnp.float32)

    out = multi_headed_attention(query, key_in, value, params, num_heads=num_heads)
    out = jax.block_until_ready(out)

    ref = reference_forward(query, key_in, value, params, num_heads)
    assert out.shape == (B, d_model, Lq), out.shape
    max_err = float(jnp.max(jnp.abs(out - ref)))
    # bf16 MXU operands (f32 accumulation) vs. an all-f32 reference -> ~1% tol (intentional).
    assert jnp.allclose(out, ref, rtol=2e-2, atol=2e-2), max_err

    print("KERNEL_OK")
</pallas_src>

<mosaic_0001>
module attributes {stable_mosaic.version = 11 : i64} {
  func.func @mha_kernel(%arg0: i32, %arg1: i32, %arg2: memref<1x32x128xbf16, #tpu.memory_space<vmem>>, %arg3: memref<1x32x128xbf16, #tpu.memory_space<vmem>>, %arg4: memref<1x32x128xbf16, #tpu.memory_space<vmem>>, %arg5: memref<32x32xbf16, #tpu.memory_space<vmem>>, %arg6: memref<32x1xf32, #tpu.memory_space<vmem>>, %arg7: memref<32x32xbf16, #tpu.memory_space<vmem>>, %arg8: memref<32x1xf32, #tpu.memory_space<vmem>>, %arg9: memref<32x32xbf16, #tpu.memory_space<vmem>>, %arg10: memref<32x1xf32, #tpu.memory_space<vmem>>, %arg11: memref<32x32xbf16, #tpu.memory_space<vmem>>, %arg12: memref<32x1xf32, #tpu.memory_space<vmem>>, %arg13: memref<1x32x128xf32, #tpu.memory_space<vmem>>) attributes {dimension_semantics = [#tpu.dimension_semantics<parallel>, #tpu.dimension_semantics<parallel>], iteration_bounds = array<i64: 2, 1>, scalar_prefetch = 0 : i64, scratch_operands = 0 : i64, tpu.core_type = #tpu.core_type<tc>, window_params = [{transform_indices = @transform_0, window_bounds = array<i64: 1, 32, 128>}, {transform_indices = @transform_1, window_bounds = array<i64: 1, 32, 128>}, {transform_indices = @transform_2, window_bounds = array<i64: 1, 32, 128>}, {pipeline_mode = #tpu.pipeline_mode<synchronous>, transform_indices = @transform_3, window_bounds = array<i64: 32, 32>}, {pipeline_mode = #tpu.pipeline_mode<synchronous>, transform_indices = @transform_4, window_bounds = array<i64: 32, 1>}, {pipeline_mode = #tpu.pipeline_mode<synchronous>, transform_indices = @transform_5, window_bounds = array<i64: 32, 32>}, {pipeline_mode = #tpu.pipeline_mode<synchronous>, transform_indices = @transform_6, window_bounds = array<i64: 32, 1>}, {pipeline_mode = #tpu.pipeline_mode<synchronous>, transform_indices = @transform_7, window_bounds = array<i64: 32, 32>}, {pipeline_mode = #tpu.pipeline_mode<synchronous>, transform_indices = @transform_8, window_bounds = array<i64: 32, 1>}, {pipeline_mode = #tpu.pipeline_mode<synchronous>, transform_indices = @transform_9, window_bounds = array<i64: 32, 32>}, {pipeline_mode = #tpu.pipeline_mode<synchronous>, transform_indices = @transform_10, window_bounds = array<i64: 32, 1>}, {transform_indices = @transform_11, window_bounds = array<i64: 1, 32, 128>}]} {
    %c0 = arith.constant 0 : index
    %c0_0 = arith.constant 0 : index
    %0 = vector.load %arg5[%c0, %c0_0] : memref<32x32xbf16, #tpu.memory_space<vmem>>, vector<32x32xbf16>
    %c0_1 = arith.constant 0 : index
    %c0_2 = arith.constant 0 : index
    %1 = vector.load %arg7[%c0_1, %c0_2] : memref<32x32xbf16, #tpu.memory_space<vmem>>, vector<32x32xbf16>
    %c0_3 = arith.constant 0 : index
    %c0_4 = arith.constant 0 : index
    %2 = vector.load %arg9[%c0_3, %c0_4] : memref<32x32xbf16, #tpu.memory_space<vmem>>, vector<32x32xbf16>
    %c0_5 = arith.constant 0 : index
    %c0_6 = arith.constant 0 : index
    %3 = vector.load %arg11[%c0_5, %c0_6] : memref<32x32xbf16, #tpu.memory_space<vmem>>, vector<32x32xbf16>
    %c0_7 = arith.constant 0 : index
    %c0_8 = arith.constant 0 : index
    %4 = vector.load %arg6[%c0_7, %c0_8] : memref<32x1xf32, #tpu.memory_space<vmem>>, vector<32x1xf32>
    %c0_9 = arith.constant 0 : index
    %c0_10 = arith.constant 0 : index
    %5 = vector.load %arg8[%c0_9, %c0_10] : memref<32x1xf32, #tpu.memory_space<vmem>>, vector<32x1xf32>
    %c0_11 = arith.constant 0 : index
    %c0_12 = arith.constant 0 : index
    %6 = vector.load %arg10[%c0_11, %c0_12] : memref<32x1xf32, #tpu.memory_space<vmem>>, vector<32x1xf32>
    %c0_13 = arith.constant 0 : index
    %c0_14 = arith.constant 0 : index
    %7 = vector.load %arg12[%c0_13, %c0_14] : memref<32x1xf32, #tpu.memory_space<vmem>>, vector<32x1xf32>
    %8 = tpu.iota {dimensions = array<i32: 0>} : vector<32x32xi32>
    %c4_i32 = arith.constant 4 : i32
    %c0_i32 = arith.constant 0 : i32
    %9 = arith.cmpi eq, %c4_i32, %c0_i32 : i32
    %c1_i32 = arith.constant 1 : i32
    %10 = arith.select %9, %c1_i32, %c4_i32 : i32
    %11 = vector.broadcast %10 : i32 to vector<32x32xi32>
    %12 = arith.remsi %8, %11 : vector<32x32xi32>
    %c0_i32_15 = arith.constant 0 : i32
    %13 = vector.broadcast %c0_i32_15 : i32 to vector<32x32xi32>
    %14 = arith.cmpi ne, %12, %13 : vector<32x32xi32>
    %c0_i32_16 = arith.constant 0 : i32
    %15 = vector.broadcast %c0_i32_16 : i32 to vector<32x32xi32>
    %16 = arith.cmpi slt, %12, %15 : vector<32x32xi32>
    %c0_i32_17 = arith.constant 0 : i32
    %17 = arith.cmpi slt, %10, %c0_i32_17 : i32
    %18 = vector.broadcast %17 : i1 to vector<32x32xi1>
    %19 = vector.broadcast %18 : vector<32x32xi1> to vector<32x32xi1>
    %20 = arith.xori %16, %19 : vector<32x32xi1>
    %21 = arith.andi %20, %14 : vector<32x32xi1>
    %22 = vector.broadcast %10 : i32 to vector<32x32xi32>
    %23 = arith.addi %12, %22 : vector<32x32xi32>
    %24 = arith.select %21, %23, %12 : vector<32x32xi1>, vector<32x32xi32>
    %25 = tpu.iota {dimensions = array<i32: 1>} : vector<32x32xi32>
    %c4_i32_18 = arith.constant 4 : i32
    %c0_i32_19 = arith.constant 0 : i32
    %26 = arith.cmpi eq, %c4_i32_18, %c0_i32_19 : i32
    %c1_i32_20 = arith.constant 1 : i32
    %27 = arith.select %26, %c1_i32_20, %c4_i32_18 : i32
    %28 = vector.broadcast %27 : i32 to vector<32x32xi32>
    %29 = arith.remsi %25, %28 : vector<32x32xi32>
    %c0_i32_21 = arith.constant 0 : i32
    %30 = vector.broadcast %c0_i32_21 : i32 to vector<32x32xi32>
    %31 = arith.cmpi ne, %29, %30 : vector<32x32xi32>
    %c0_i32_22 = arith.constant 0 : i32
    %32 = vector.broadcast %c0_i32_22 : i32 to vector<32x32xi32>
    %33 = arith.cmpi slt, %29, %32 : vector<32x32xi32>
    %c0_i32_23 = arith.constant 0 : i32
    %34 = arith.cmpi slt, %27, %c0_i32_23 : i32
    %35 = vector.broadcast %34 : i1 to vector<32x32xi1>
    %36 = vector.broadcast %35 : vector<32x32xi1> to vector<32x32xi1>
    %37 = arith.xori %33, %36 : vector<32x32xi1>
    %38 = arith.andi %37, %31 : vector<32x32xi1>
    %39 = vector.broadcast %27 : i32 to vector<32x32xi32>
    %40 = arith.addi %29, %39 : vector<32x32xi32>
    %41 = arith.select %38, %40, %29 : vector<32x32xi1>, vector<32x32xi32>
    %42 = arith.cmpi eq, %24, %41 : vector<32x32xi32>
    %43 = tpu.iota {dimensions = array<i32: 1>} : vector<32x128xi32>
    %c24_i32 = arith.constant 24 : i32
    %44 = vector.broadcast %c24_i32 : i32 to vector<32x128xi32>
    %45 = arith.cmpi slt, %43, %44 : vector<32x128xi32>
    %c0_24 = arith.constant 0 : index
    %c0_25 = arith.constant 0 : index
    %c0_26 = arith.constant 0 : index
    %46 = vector.load %arg2[%c0_24, %c0_25, %c0_26] : memref<1x32x128xbf16, #tpu.memory_space<vmem>>, vector<1x32x128xbf16>
    %47 = vector.shape_cast %46 : vector<1x32x128xbf16> to vector<32x128xbf16>
    %c0_27 = arith.constant 0 : index
    %c0_28 = arith.constant 0 : index
    %c0_29 = arith.constant 0 : index
    %48 = vector.load %arg3[%c0_27, %c0_28, %c0_29] : memref<1x32x128xbf16, #tpu.memory_space<vmem>>, vector<1x32x128xbf16>
    %49 = vector.shape_cast %48 : vector<1x32x128xbf16> to vector<32x128xbf16>
    %c0_30 = arith.constant 0 : index
    %c0_31 = arith.constant 0 : index
    %c0_32 = arith.constant 0 : index
    %50 = vector.load %arg4[%c0_30, %c0_31, %c0_32] : memref<1x32x128xbf16, #tpu.memory_space<vmem>>, vector<1x32x128xbf16>
    %51 = vector.shape_cast %50 : vector<1x32x128xbf16> to vector<32x128xbf16>
    %cst = arith.constant dense<0.000000e+00> : vector<32x128xf32>
    %52 = tpu.matmul %0, %47, %cst {dimension_numbers = #tpu.dot_dimension_numbers<[1], [0], [0], [1], [0, 0, 1, 1], [], []>} : vector<32x32xbf16>, vector<32x128xbf16>, vector<32x128xf32> -> vector<32x128xf32>
    %53 = vector.broadcast %4 : vector<32x1xf32> to vector<32x128xf32>
    %54 = arith.addf %52, %53 : vector<32x128xf32>
    %cst_33 = arith.constant dense<0.000000e+00> : vector<32x128xf32>
    %55 = tpu.matmul %1, %49, %cst_33 {dimension_numbers = #tpu.dot_dimension_numbers<[1], [0], [0], [1], [0, 0, 1, 1], [], []>} : vector<32x32xbf16>, vector<32x128xbf16>, vector<32x128xf32> -> vector<32x128xf32>
    %56 = vector.broadcast %5 : vector<32x1xf32> to vector<32x128xf32>
    %57 = arith.addf %55, %56 : vector<32x128xf32>
    %cst_34 = arith.constant dense<0.000000e+00> : vector<32x128xf32>
    %58 = tpu.matmul %2, %51, %cst_34 {dimension_numbers = #tpu.dot_dimension_numbers<[1], [0], [0], [1], [0, 0, 1, 1], [], []>} : vector<32x32xbf16>, vector<32x128xbf16>, vector<32x128xf32> -> vector<32x128xf32>
    %59 = vector.broadcast %6 : vector<32x1xf32> to vector<32x128xf32>
    %60 = arith.addf %58, %59 : vector<32x128xf32>
    %cst_35 = arith.constant 0.000000e+00 : f32
    %61 = vector.broadcast %cst_35 : f32 to vector<32x128xf32>
    %62 = arith.cmpf ogt, %54, %61 : vector<32x128xf32>
    %cst_36 = arith.constant 1.000000e+00 : f32
    %63 = vector.broadcast %cst_36 : f32 to vector<32x128xf32>
    %64 = arith.addf %54, %63 : vector<32x128xf32>
    %cst_37 = arith.constant 0.000000e+00 : f32
    %65 = vector.broadcast %cst_37 : f32 to vector<32x128xf32>
    %66 = arith.minimumf %54, %65 : vector<32x128xf32>
    %67 = math.exp %66 : vector<32x128xf32>
    %68 = arith.select %62, %64, %67 : vector<32x128xi1>, vector<32x128xf32>
    %cst_38 = arith.constant 0.000000e+00 : f32
    %69 = vector.broadcast %cst_38 : f32 to vector<32x128xf32>
    %70 = arith.cmpf ogt, %57, %69 : vector<32x128xf32>
    %cst_39 = arith.constant 1.000000e+00 : f32
    %71 = vector.broadcast %cst_39 : f32 to vector<32x128xf32>
    %72 = arith.addf %57, %71 : vector<32x128xf32>
    %cst_40 = arith.constant 0.000000e+00 : f32
    %73 = vector.broadcast %cst_40 : f32 to vector<32x128xf32>
    %74 = arith.minimumf %57, %73 : vector<32x128xf32>
    %75 = math.exp %74 : vector<32x128xf32>
    %76 = arith.select %70, %72, %75 : vector<32x128xi1>, vector<32x128xf32>
    %cst_41 = arith.constant 0.000000e+00 : f32
    %77 = vector.broadcast %cst_41 : f32 to vector<32x128xf32>
    %78 = arith.select %45, %76, %77 : vector<32x128xi1>, vector<32x128xf32>
    %79 = arith.truncf %60 : vector<32x128xf32> to vector<32x128xbf16>
    %80 = arith.truncf %78 : vector<32x128xf32> to vector<32x128xbf16>
    %cst_42 = arith.constant dense<0.000000e+00> : vector<32x32xf32>
    %81 = tpu.matmul %79, %80, %cst_42 {dimension_numbers = #tpu.dot_dimension_numbers<[1], [1], [0], [0], [0, 0, 1, 0], [], []>} : vector<32x128xbf16>, vector<32x128xbf16>, vector<32x32xf32> -> vector<32x32xf32>
    %cst_43 = arith.constant 0.000000e+00 : f32
    %82 = vector.broadcast %cst_43 : f32 to vector<32x32xf32>
    %83 = arith.select %42, %81, %82 : vector<32x32xi1>, vector<32x32xf32>
    %cst_44 = arith.constant dense<0.000000e+00> : vector<32xf32>
    %84 = vector.multi_reduction <add>, %78, %cst_44 [1] : vector<32x128xf32> to vector<32xf32>
    %85 = vector.shape_cast %84 : vector<32xf32> to vector<32x1xf32>
    %86 = vector.broadcast %85 : vector<32x1xf32> to vector<32x128xf32>
    %87 = arith.mulf %86, %68 : vector<32x128xf32>
    %c4_i32_45 = arith.constant 4 : i32
    %88 = tpu.dynamic_rotate %87 by %c4_i32_45 dim 0 : vector<32x128xf32>, i32 -> vector<32x128xf32>
    %89 = arith.addf %87, %88 : vector<32x128xf32>
    %c8_i32 = arith.constant 8 : i32
    %90 = tpu.dynamic_rotate %89 by %c8_i32 dim 0 : vector<32x128xf32>, i32 -> vector<32x128xf32>
    %91 = arith.addf %89, %90 : vector<32x128xf32>
    %c16_i32 = arith.constant 16 : i32
    %92 = tpu.dynamic_rotate %91 by %c16_i32 dim 0 : vector<32x128xf32>, i32 -> vector<32x128xf32>
    %93 = arith.addf %91, %92 : vector<32x128xf32>
    %cst_46 = arith.constant 9.99999997E-7 : f32
    %94 = vector.broadcast %cst_46 : f32 to vector<32x128xf32>
    %95 = arith.addf %93, %94 : vector<32x128xf32>
    %96 = tpu.reciprocal %95 : vector<32x128xf32> -> vector<32x128xf32>
    %97 = arith.truncf %83 : vector<32x32xf32> to vector<32x32xbf16>
    %98 = arith.truncf %68 : vector<32x128xf32> to vector<32x128xbf16>
    %cst_47 = arith.constant dense<0.000000e+00> : vector<32x128xf32>
    %99 = tpu.matmul %97, %98, %cst_47 {dimension_numbers = #tpu.dot_dimension_numbers<[1], [0], [0], [1], [0, 0, 1, 1], [], []>} : vector<32x32xbf16>, vector<32x128xbf16>, vector<32x128xf32> -> vector<32x128xf32>
    %100 = arith.mulf %99, %96 : vector<32x128xf32>
    %101 = arith.truncf %100 : vector<32x128xf32> to vector<32x128xbf16>
    %cst_48 = arith.constant dense<0.000000e+00> : vector<32x128xf32>
    %102 = tpu.matmul %3, %101, %cst_48 {dimension_numbers = #tpu.dot_dimension_numbers<[1], [0], [0], [1], [0, 0, 1, 1], [], []>} : vector<32x32xbf16>, vector<32x128xbf16>, vector<32x128xf32> -> vector<32x128xf32>
    %103 = vector.broadcast %7 : vector<32x1xf32> to vector<32x128xf32>
    %104 = arith.addf %102, %103 : vector<32x128xf32>
    %c0_49 = arith.constant 0 : index
    %c0_50 = arith.constant 0 : index
    %c0_51 = arith.constant 0 : index
    %105 = vector.load %arg13[%c0_49, %c0_50, %c0_51] : memref<1x32x128xf32, #tpu.memory_space<vmem>>, vector<1x32x128xf32>
    %106 = vector.shape_cast %105 : vector<1x32x128xf32> to vector<32x128xf32>
    %107 = vector.shape_cast %104 : vector<32x128xf32> to vector<1x32x128xf32>
    tpu.vector_store %arg13[%c0_49, %c0_50, %c0_51], %107 {strides = array<i32>} : memref<1x32x128xf32, #tpu.memory_space<vmem>>, vector<1x32x128xf32>,
    return
  }
  func.func @transform_0(%arg0: i32, %arg1: i32) -> (i32, i32, i32) {
    %c0_i32 = arith.constant 0 : i32
    %c0_i32_0 = arith.constant 0 : i32
    return %arg0, %c0_i32, %arg1 : i32, i32, i32
  }
  func.func @transform_1(%arg0: i32, %arg1: i32) -> (i32, i32, i32) {
    %c0_i32 = arith.constant 0 : i32
    %c0_i32_0 = arith.constant 0 : i32
    %c0_i32_1 = arith.constant 0 : i32
    return %arg0, %c0_i32, %c0_i32_0 : i32, i32, i32
  }
  func.func @transform_2(%arg0: i32, %arg1: i32) -> (i32, i32, i32) {
    %c0_i32 = arith.constant 0 : i32
    %c0_i32_0 = arith.constant 0 : i32
    %c0_i32_1 = arith.constant 0 : i32
    return %arg0, %c0_i32, %c0_i32_0 : i32, i32, i32
  }
  func.func @transform_3(%arg0: i32, %arg1: i32) -> (i32, i32) {
    %c0_i32 = arith.constant 0 : i32
    %c0_i32_0 = arith.constant 0 : i32
    %c0_i32_1 = arith.constant 0 : i32
    return %c0_i32, %c0_i32_0 : i32, i32
  }
  func.func @transform_4(%arg0: i32, %arg1: i32) -> (i32, i32) {
    %c0_i32 = arith.constant 0 : i32
    %c0_i32_0 = arith.constant 0 : i32
    %c0_i32_1 = arith.constant 0 : i32
    return %c0_i32, %c0_i32_0 : i32, i32
  }
  func.func @transform_5(%arg0: i32, %arg1: i32) -> (i32, i32) {
    %c0_i32 = arith.constant 0 : i32
    %c0_i32_0 = arith.constant 0 : i32
    %c0_i32_1 = arith.constant 0 : i32
    return %c0_i32, %c0_i32_0 : i32, i32
  }
  func.func @transform_6(%arg0: i32, %arg1: i32) -> (i32, i32) {
    %c0_i32 = arith.constant 0 : i32
    %c0_i32_0 = arith.constant 0 : i32
    %c0_i32_1 = arith.constant 0 : i32
    return %c0_i32, %c0_i32_0 : i32, i32
  }
  func.func @transform_7(%arg0: i32, %arg1: i32) -> (i32, i32) {
    %c0_i32 = arith.constant 0 : i32
    %c0_i32_0 = arith.constant 0 : i32
    %c0_i32_1 = arith.constant 0 : i32
    return %c0_i32, %c0_i32_0 : i32, i32
  }
  func.func @transform_8(%arg0: i32, %arg1: i32) -> (i32, i32) {
    %c0_i32 = arith.constant 0 : i32
    %c0_i32_0 = arith.constant 0 : i32
    %c0_i32_1 = arith.constant 0 : i32
    return %c0_i32, %c0_i32_0 : i32, i32
  }
  func.func @transform_9(%arg0: i32, %arg1: i32) -> (i32, i32) {
    %c0_i32 = arith.constant 0 : i32
    %c0_i32_0 = arith.constant 0 : i32
    %c0_i32_1 = arith.constant 0 : i32
    return %c0_i32, %c0_i32_0 : i32, i32
  }
  func.func @transform_10(%arg0: i32, %arg1: i32) -> (i32, i32) {
    %c0_i32 = arith.constant 0 : i32
    %c0_i32_0 = arith.constant 0 : i32
    %c0_i32_1 = arith.constant 0 : i32
    return %c0_i32, %c0_i32_0 : i32, i32
  }
  func.func @transform_11(%arg0: i32, %arg1: i32) -> (i32, i32, i32) {
    %c0_i32 = arith.constant 0 : i32
    %c0_i32_0 = arith.constant 0 : i32
    return %arg0, %c0_i32, %arg1 : i32, i32, i32
  }
}

</mosaic_0001>

<llo_original>
// kernel: multi_headed_attention.1
$region0: #{multi_headed_attention.1}
  #allocation0 [shape = 'u32[]', space=smem, size = 0x4, offset = 0x4, fixed_abs, tag = 'smem constant byte address 0x4 - core index']
  #allocation1 [shape = 'u32[144,128]{1,0:T(1,128)}', space=vmem, size = 0x12000, scoped, tag = 'internal scratch']
  %s0 = inlined_call_operand.vmem [shape: bf16[2,32,128], index: 0, kind: input, shape index: {}]
  %s1 = inlined_call_operand.vmem [shape: bf16[2,32,128], index: 1, kind: input, shape index: {}]
  %s2 = inlined_call_operand.vmem [shape: bf16[2,32,128], index: 2, kind: input, shape index: {}]
  %s3 = inlined_call_operand.vmem [shape: bf16[32,32], index: 3, kind: input, shape index: {}]
  %s4 = inlined_call_operand.vmem [shape: f32[32,1], index: 4, kind: input, shape index: {}]
  %s5 = inlined_call_operand.vmem [shape: bf16[32,32], index: 5, kind: input, shape index: {}]
  %s6 = inlined_call_operand.vmem [shape: f32[32,1], index: 6, kind: input, shape index: {}]
  %s7 = inlined_call_operand.vmem [shape: bf16[32,32], index: 7, kind: input, shape index: {}]
  %s8 = inlined_call_operand.vmem [shape: f32[32,1], index: 8, kind: input, shape index: {}]
  %s9 = inlined_call_operand.vmem [shape: bf16[32,32], index: 9, kind: input, shape index: {}]
  %s10 = inlined_call_operand.vmem [shape: f32[32,1], index: 10, kind: input, shape index: {}]
  %s11 = inlined_call_operand.vmem [shape: f32[2,32,128], index: 11, kind: output, shape index: {}]
  %s12 = sld [smem:[#allocation0]]
  $region77: #{multi_headed_attention.1} parent=0
    _
  %s14 = ssub.s32 1, %s12
  %s15 = scalar_select 0, %s14, %s12
  loop: start=0, step=1, limit=4
  $region2: #{multi_headed_attention.1} parent=0 // loop_pre_header
    _
  $region3: #{multi_headed_attention.1} parent=0 // loop_header
    %s17 = sphi 0, %s21
    %p18 = scmp.ge.s32.totalorder %s17, 4
    %s24 = sphi 0, %s36
    %s25 = sphi 0, %s32
    %s26 = sphi 0, %s24
    %s27 = sphi 0, %s25
    %s28 = sphi 0, %s26
    %s29 = sphi 0, %s27
    %s41 = sphi 0, %s43
    %s44 = sphi 0, %s41
    %s45 = sphi 0, %s44
    %s61 = sphi 0, %s45
    %s67 = sphi 0, %s69
    %s70 = sphi 0, %s67
    %s71 = sphi 0, %s70
    %s87 = sphi 0, %s71
    %s93 = sphi 0, %s95
    %s96 = sphi 0, %s93
    %s97 = sphi 0, %s96
    %s113 = sphi 0, %s97
    %s117 = sphi 0, %s117
    %s119 = sphi 0, %s117
    %s120 = sphi 0, %s119
    %s134 = sphi 0, %s120
    %s138 = sphi 0, %s138
    %s140 = sphi 0, %s138
    %s141 = sphi 0, %s140
    %s155 = sphi 0, %s141
    %s159 = sphi 0, %s159
    %s161 = sphi 0, %s159
    %s162 = sphi 0, %s161
    %s176 = sphi 0, %s162
    %s180 = sphi 0, %s180
    %s182 = sphi 0, %s180
    %s183 = sphi 0, %s182
    %s197 = sphi 0, %s183
    %s201 = sphi 0, %s201
    %s203 = sphi 0, %s201
    %s204 = sphi 0, %s203
    %s218 = sphi 0, %s204
    %s222 = sphi 0, %s222
    %s224 = sphi 0, %s222
    %s225 = sphi 0, %s224
    %s239 = sphi 0, %s225
    %s243 = sphi 0, %s243
    %s245 = sphi 0, %s243
    %s246 = sphi 0, %s245
    %s260 = sphi 0, %s246
    %s264 = sphi 0, %s264
    %s266 = sphi 0, %s264
    %s267 = sphi 0, %s266
    %s281 = sphi 0, %s267
    %s289 = sphi 0, %s291
    %s292 = sphi 0, %s289
    %s293 = sphi 0, %s292
    %s309 = sphi 0, %s293
  $region4: #{multi_headed_attention.1} parent=0 // loop_header_branch
    %20 = sbr.rel (%p18) target = $region8
  $region5: #{multi_headed_attention.1} parent=0 // loop_body
    %s22 = ssub.s32 %s17, 1
    %s23 = ssub.s32 %s17, 2
    %s30 = sadd.s32 1, %s25
    %p31 = scmp.ge.s32.totalorder %s30, 1
    %s32 = scalar_select %p31, 0, %s30
    %s33 = sadd.s32 1, %s24
    %s34 = scalar_select %p31, %s33, %s24
    %p35 = scmp.ge.s32.totalorder %s34, 2
    %s36 = scalar_select %p35, 0, %s34
    %s37 = ssub.s32 %s24, %s36
    %s38 = ssub.s32 %s25, %s32
    %s39 = sor.u32 %s37, %s38
    %p40 = scmp.eq.s32.totalorder %s39, 0
    %s42 = sadd.s32 %s41, 1
    %s43 = scalar_select %p40, %s41, %s42
    %p46 = pneg %p40
    %p47 = scmp.eq.s32.totalorder %s17, 1
    %p48 = por %p46, %p47
    %p49 = scmp.ne.s32.totalorder %s41, %s44
    %p50 = scmp.eq.s32.totalorder %s17, 0
    %p51 = por %p49, %p50
    %p52 = scmp.ne.s32.totalorder %s41, %s44
    %p53 = scmp.eq.s32.totalorder %s22, 1
    %p54 = por %p52, %p53
    %p55 = scmp.ne.s32.totalorder %s44, %s45
    %p56 = scmp.eq.s32.totalorder %s22, 0
    %p57 = por %p55, %p56
    %p58 = scmp.ne.s32.totalorder %s44, %s45
    %p59 = scmp.eq.s32.totalorder %s23, 1
    %p60 = por %p58, %p59
    %p62 = scmp.ne.s32.totalorder %s45, %s61
    %p63 = scmp.eq.s32.totalorder %s23, 0
    %p64 = por %p62, %p63
    %s65 = ssub.s32 %s24, %s36
    %p66 = scmp.eq.s32.totalorder %s65, 0
    %s68 = sadd.s32 %s67, 1
    %s69 = scalar_select %p66, %s67, %s68
    %p72 = pneg %p66
    %p73 = scmp.eq.s32.totalorder %s17, 1
    %p74 = por %p72, %p73
    %p75 = scmp.ne.s32.totalorder %s67, %s70
    %p76 = scmp.eq.s32.totalorder %s17, 0
    %p77 = por %p75, %p76
    %p78 = scmp.ne.s32.totalorder %s67, %s70
    %p79 = scmp.eq.s32.totalorder %s22, 1
    %p80 = por %p78, %p79
    %p81 = scmp.ne.s32.totalorder %s70, %s71
    %p82 = scmp.eq.s32.totalorder %s22, 0
    %p83 = por %p81, %p82
    %p84 = scmp.ne.s32.totalorder %s70, %s71
    %p85 = scmp.eq.s32.totalorder %s23, 1
    %p86 = por %p84, %p85
    %p88 = scmp.ne.s32.totalorder %s71, %s87
    %p89 = scmp.eq.s32.totalorder %s23, 0
    %p90 = por %p88, %p89
    %s91 = ssub.s32 %s24, %s36
    %p92 = scmp.eq.s32.totalorder %s91, 0
    %s94 = sadd.s32 %s93, 1
    %s95 = scalar_select %p92, %s93, %s94
    %p98 = pneg %p92
    %p99 = scmp.eq.s32.totalorder %s17, 1
    %p100 = por %p98, %p99
    %p101 = scmp.ne.s32.totalorder %s93, %s96
    %p102 = scmp.eq.s32.totalorder %s17, 0
    %p103 = por %p101, %p102
    %p104 = scmp.ne.s32.totalorder %s93, %s96
    %p105 = scmp.eq.s32.totalorder %s22, 1
    %p106 = por %p104, %p105
    %p107 = scmp.ne.s32.totalorder %s96, %s97
    %p108 = scmp.eq.s32.totalorder %s22, 0
    %p109 = por %p107, %p108
    %p110 = scmp.ne.s32.totalorder %s96, %s97
    %p111 = scmp.eq.s32.totalorder %s23, 1
    %p112 = por %p110, %p111
    %p114 = scmp.ne.s32.totalorder %s97, %s113
    %p115 = scmp.eq.s32.totalorder %s23, 0
    %p116 = por %p114, %p115
    %s118 = sadd.s32 %s117, 1
    %p121 = scmp.eq.s32.totalorder %s17, 1
    %p122 = scmp.ne.s32.totalorder %s117, %s119
    %p123 = scmp.eq.s32.totalorder %s17, 0
    %p124 = por %p122, %p123
    %p125 = scmp.ne.s32.totalorder %s117, %s119
    %p126 = scmp.eq.s32.totalorder %s22, 1
    %p127 = por %p125, %p126
    %p128 = scmp.ne.s32.totalorder %s119, %s120
    %p129 = scmp.eq.s32.totalorder %s22, 0
    %p130 = por %p128, %p129
    %p131 = scmp.ne.s32.totalorder %s119, %s120
    %p132 = scmp.eq.s32.totalorder %s23, 1
    %p133 = por %p131, %p132
    %p135 = scmp.ne.s32.totalorder %s120, %s134
    %p136 = scmp.eq.s32.totalorder %s23, 0
    %p137 = por %p135, %p136
    %s139 = sadd.s32 %s138, 1
    %p142 = scmp.eq.s32.totalorder %s17, 1
    %p143 = scmp.ne.s32.totalorder %s138, %s140
    %p144 = scmp.eq.s32.totalorder %s17, 0
    %p145 = por %p143, %p144
    %p146 = scmp.ne.s32.totalorder %s138, %s140
    %p147 = scmp.eq.s32.totalorder %s22, 1
    %p148 = por %p146, %p147
    %p149 = scmp.ne.s32.totalorder %s140, %s141
    %p150 = scmp.eq.s32.totalorder %s22, 0
    %p151 = por %p149, %p150
    %p152 = scmp.ne.s32.totalorder %s140, %s141
    %p153 = scmp.eq.s32.totalorder %s23, 1
    %p154 = por %p152, %p153
    %p156 = scmp.ne.s32.totalorder %s141, %s155
    %p157 = scmp.eq.s32.totalorder %s23, 0
    %p158 = por %p156, %p157
    %s160 = sadd.s32 %s159, 1
    %p163 = scmp.eq.s32.totalorder %s17, 1
    %p164 = scmp.ne.s32.totalorder %s159, %s161
    %p165 = scmp.eq.s32.totalorder %s17, 0
    %p166 = por %p164, %p165
    %p167 = scmp.ne.s32.totalorder %s159, %s161
    %p168 = scmp.eq.s32.totalorder %s22, 1
    %p169 = por %p167, %p168
    %p170 = scmp.ne.s32.totalorder %s161, %s162
    %p171 = scmp.eq.s32.totalorder %s22, 0
    %p172 = por %p170, %p171
    %p173 = scmp.ne.s32.totalorder %s161, %s162
    %p174 = scmp.eq.s32.totalorder %s23, 1
    %p175 = por %p173, %p174
    %p177 = scmp.ne.s32.totalorder %s162, %s176
    %p178 = scmp.eq.s32.totalorder %s23, 0
    %p179 = por %p177, %p178
    %s181 = sadd.s32 %s180, 1
    %p184 = scmp.eq.s32.totalorder %s17, 1
    %p185 = scmp.ne.s32.totalorder %s180, %s182
    %p186 = scmp.eq.s32.totalorder %s17, 0
    %p187 = por %p185, %p186
    %p188 = scmp.ne.s32.totalorder %s180, %s182
    %p189 = scmp.eq.s32.totalorder %s22, 1
    %p190 = por %p188, %p189
    %p191 = scmp.ne.s32.totalorder %s182, %s183
    %p192 = scmp.eq.s32.totalorder %s22, 0
    %p193 = por %p191, %p192
    %p194 = scmp.ne.s32.totalorder %s182, %s183
    %p195 = scmp.eq.s32.totalorder %s23, 1
    %p196 = por %p194, %p195
    %p198 = scmp.ne.s32.totalorder %s183, %s197
    %p199 = scmp.eq.s32.totalorder %s23, 0
    %p200 = por %p198, %p199
    %s202 = sadd.s32 %s201, 1
    %p205 = scmp.eq.s32.totalorder %s17, 1
    %p206 = scmp.ne.s32.totalorder %s201, %s203
    %p207 = scmp.eq.s32.totalorder %s17, 0
    %p208 = por %p206, %p207
    %p209 = scmp.ne.s32.totalorder %s201, %s203
    %p210 = scmp.eq.s32.totalorder %s22, 1
    %p211 = por %p209, %p210
    %p212 = scmp.ne.s32.totalorder %s203, %s204
    %p213 = scmp.eq.s32.totalorder %s22, 0
    %p214 = por %p212, %p213
    %p215 = scmp.ne.s32.totalorder %s203, %s204
    %p216 = scmp.eq.s32.totalorder %s23, 1
    %p217 = por %p215, %p216
    %p219 = scmp.ne.s32.totalorder %s204, %s218
    %p220 = scmp.eq.s32.totalorder %s23, 0
    %p221 = por %p219, %p220
    %s223 = sadd.s32 %s222, 1
    %p226 = scmp.eq.s32.totalorder %s17, 1
    %p227 = scmp.ne.s32.totalorder %s222, %s224
    %p228 = scmp.eq.s32.totalorder %s17, 0
    %p229 = por %p227, %p228
    %p230 = scmp.ne.s32.totalorder %s222, %s224
    %p231 = scmp.eq.s32.totalorder %s22, 1
    %p232 = por %p230, %p231
    %p233 = scmp.ne.s32.totalorder %s224, %s225
    %p234 = scmp.eq.s32.totalorder %s22, 0
    %p235 = por %p233, %p234
    %p236 = scmp.ne.s32.totalorder %s224, %s225
    %p237 = scmp.eq.s32.totalorder %s23, 1
    %p238 = por %p236, %p237
    %p240 = scmp.ne.s32.totalorder %s225, %s239
    %p241 = scmp.eq.s32.totalorder %s23, 0
    %p242 = por %p240, %p241
    %s244 = sadd.s32 %s243, 1
    %p247 = scmp.eq.s32.totalorder %s17, 1
    %p248 = scmp.ne.s32.totalorder %s243, %s245
    %p249 = scmp.eq.s32.totalorder %s17, 0
    %p250 = por %p248, %p249
    %p251 = scmp.ne.s32.totalorder %s243, %s245
    %p252 = scmp.eq.s32.totalorder %s22, 1
    %p253 = por %p251, %p252
    %p254 = scmp.ne.s32.totalorder %s245, %s246
    %p255 = scmp.eq.s32.totalorder %s22, 0
    %p256 = por %p254, %p255
    %p257 = scmp.ne.s32.totalorder %s245, %s246
    %p258 = scmp.eq.s32.totalorder %s23, 1
    %p259 = por %p257, %p258
    %p261 = scmp.ne.s32.totalorder %s246, %s260
    %p262 = scmp.eq.s32.totalorder %s23, 0
    %p263 = por %p261, %p262
    %s265 = sadd.s32 %s264, 1
    %p268 = scmp.eq.s32.totalorder %s17, 1
    %p269 = scmp.ne.s32.totalorder %s264, %s266
    %p270 = scmp.eq.s32.totalorder %s17, 0
    %p271 = por %p269, %p270
    %p272 = scmp.ne.s32.totalorder %s264, %s266
    %p273 = scmp.eq.s32.totalorder %s22, 1
    %p274 = por %p272, %p273
    %p275 = scmp.ne.s32.totalorder %s266, %s267
    %p276 = scmp.eq.s32.totalorder %s22, 0
    %p277 = por %p275, %p276
    %p278 = scmp.ne.s32.totalorder %s266, %s267
    %p279 = scmp.eq.s32.totalorder %s23, 1
    %p280 = por %p278, %p279
    %p282 = scmp.ne.s32.totalorder %s267, %s281
    %p283 = scmp.eq.s32.totalorder %s23, 0
    %p284 = por %p282, %p283
    %s285 = ssub.s32 %s24, %s36
    %s286 = ssub.s32 %s25, %s32
    %s287 = sor.u32 %s285, %s286
    %p288 = scmp.eq.s32.totalorder %s287, 0
    %s290 = sadd.s32 %s289, 1
    %s291 = scalar_select %p288, %s289, %s290
    %p294 = pneg %p288
    %p295 = scmp.eq.s32.totalorder %s17, 1
    %p296 = por %p294, %p295
    %p297 = scmp.ne.s32.totalorder %s289, %s292
    %p298 = scmp.eq.s32.totalorder %s17, 0
    %p299 = por %p297, %p298
    %p300 = scmp.ne.s32.totalorder %s289, %s292
    %p301 = scmp.eq.s32.totalorder %s22, 1
    %p302 = por %p300, %p301
    %p303 = scmp.ne.s32.totalorder %s292, %s293
    %p304 = scmp.eq.s32.totalorder %s22, 0
    %p305 = por %p303, %p304
    %p306 = scmp.ne.s32.totalorder %s292, %s293
    %p307 = scmp.eq.s32.totalorder %s23, 1
    %p308 = por %p306, %p307
    %p310 = scmp.ne.s32.totalorder %s293, %s309
    %p311 = scmp.eq.s32.totalorder %s23, 0
    %p312 = por %p310, %p311
    %p313 = scmp.le.s32.totalorder 1, %s17
    %p314 = scmp.lt.s32.totalorder %s17, 3
    %p315 = pnand %p313, %p314
    %p316 = pneg %p315
    // Predicated region
    $region9: #{multi_headed_attention.1} parent=5 // pred_check
      _
    $region10: #{multi_headed_attention.1} parent=5 // pred_check_branch
      %318 = sbr.rel (%p315) target = $region12
    $region11: #{multi_headed_attention.1} parent=5 // pred_region
      %s319 = ssub.s32 %s17, 1
      // Predicated region
      $region13: #{multi_headed_attention.1} parent=11 // pred_check
        %p320 = pneg %p130
      $region14: #{multi_headed_attention.1} parent=11 // pred_check_branch
        %322 = sbr.rel (%p320) target = $region16
      $region15: #{multi_headed_attention.1} parent=11 // pred_region
        _
      $region16: #{multi_headed_attention.1} parent=11 // pred_fallthru
        _
      // Predicated region
      $region17: #{multi_headed_attention.1} parent=11 // pred_check
        %p323 = pneg %p151
      $region18: #{multi_headed_attention.1} parent=11 // pred_check_branch
        %325 = sbr.rel (%p323) target = $region20
      $region19: #{multi_headed_attention.1} parent=11 // pred_region
        _
      $region20: #{multi_headed_attention.1} parent=11 // pred_fallthru
        _
      // Predicated region
      $region21: #{multi_headed_attention.1} parent=11 // pred_check
        %p326 = pneg %p172
      $region22: #{multi_headed_attention.1} parent=11 // pred_check_branch
        %328 = sbr.rel (%p326) target = $region24
      $region23: #{multi_headed_attention.1} parent=11 // pred_region
        _
      $region24: #{multi_headed_attention.1} parent=11 // pred_fallthru
        _
      // Predicated region
      $region25: #{multi_headed_attention.1} parent=11 // pred_check
        %p329 = pneg %p193
      $region26: #{multi_headed_attention.1} parent=11 // pred_check_branch
        %331 = sbr.rel (%p329) target = $region28
      $region27: #{multi_headed_attention.1} parent=11 // pred_region
        _
      $region28: #{multi_headed_attention.1} parent=11 // pred_fallthru
        _
      // Predicated region
      $region29: #{multi_headed_attention.1} parent=11 // pred_check
        %p332 = pneg %p214
      $region30: #{multi_headed_attention.1} parent=11 // pred_check_branch
        %334 = sbr.rel (%p332) target = $region32
      $region31: #{multi_headed_attention.1} parent=11 // pred_region
        _
      $region32: #{multi_headed_attention.1} parent=11 // pred_fallthru
        _
      // Predicated region
      $region33: #{multi_headed_attention.1} parent=11 // pred_check
        %p335 = pneg %p235
      $region34: #{multi_headed_attention.1} parent=11 // pred_check_branch
        %337 = sbr.rel (%p335) target = $region36
      $region35: #{multi_headed_attention.1} parent=11 // pred_region
        _
      $region36: #{multi_headed_attention.1} parent=11 // pred_fallthru
        _
      // Predicated region
      $region37: #{multi_headed_attention.1} parent=11 // pred_check
        %p338 = pneg %p256
      $region38: #{multi_headed_attention.1} parent=11 // pred_check_branch
        %340 = sbr.rel (%p338) target = $region40
      $region39: #{multi_headed_attention.1} parent=11 // pred_region
        _
      $region40: #{multi_headed_attention.1} parent=11 // pred_fallthru
        _
      // Predicated region
      $region41: #{multi_headed_attention.1} parent=11 // pred_check
        %p341 = pneg %p277
      $region42: #{multi_headed_attention.1} parent=11 // pred_check_branch
        %343 = sbr.rel (%p341) target = $region44
      $region43: #{multi_headed_attention.1} parent=11 // pred_region
        _
      $region44: #{multi_headed_attention.1} parent=11 // pred_fallthru
        _
    $region12: #{multi_headed_attention.1} parent=5 // pred_fallthru
      _
    %p344 = scmp.lt.s32.totalorder %s17, 2
    // Predicated region
    $region45: #{multi_headed_attention.1} parent=5 // pred_check
      %p345 = pneg %p344
    $region46: #{multi_headed_attention.1} parent=5 // pred_check_branch
      %347 = sbr.rel (%p345) target = $region48
    $region47: #{multi_headed_attention.1} parent=5 // pred_region
      // Predicated region
      $region49: #{multi_headed_attention.1} parent=47 // pred_check
        %p348 = pneg %p51
      $region50: #{multi_headed_attention.1} parent=47 // pred_check_branch
        %350 = sbr.rel (%p348) target = $region52
      $region51: #{multi_headed_attention.1} parent=47 // pred_region
        %p351 = scmp.lt.s32.totalorder %s24, 1
        %s352 = scalar_select %p351, %s24, 1
        %p353 = scmp.lt.s32.totalorder %s25, 0
        %s354 = scalar_select %p353, %s25, 0
        %s355 = smul.addr %s352, 4
        %s356 = sadd.s32 %s354, %s355
        %s357 = smul.addr %s356, 4
        %s358 = scalar_lea.vmem %s0, %s357
      $region52: #{multi_headed_attention.1} parent=47 // pred_fallthru
        _
      // Predicated region
      $region53: #{multi_headed_attention.1} parent=47 // pred_check
        %p359 = pneg %p77
      $region54: #{multi_headed_attention.1} parent=47 // pred_check_branch
        %361 = sbr.rel (%p359) target = $region56
      $region55: #{multi_headed_attention.1} parent=47 // pred_region
        %p362 = scmp.lt.s32.totalorder %s24, 1
        %s363 = scalar_select %p362, %s24, 1
        %s364 = smul.addr %s363, 4
        %s365 = smul.addr %s364, 4
        %s366 = scalar_lea.vmem %s1, %s365
      $region56: #{multi_headed_attention.1} parent=47 // pred_fallthru
        _
      // Predicated region
      $region57: #{multi_headed_attention.1} parent=47 // pred_check
        %p367 = pneg %p103
      $region58: #{multi_headed_attention.1} parent=47 // pred_check_branch
        %369 = sbr.rel (%p367) target = $region60
      $region59: #{multi_headed_attention.1} parent=47 // pred_region
        %p370 = scmp.lt.s32.totalorder %s24, 1
        %s371 = scalar_select %p370, %s24, 1
        %s372 = smul.addr %s371, 4
        %s373 = smul.addr %s372, 4
        %s374 = scalar_lea.vmem %s2, %s373
      $region60: #{multi_headed_attention.1} parent=47 // pred_fallthru
        _
    $region48: #{multi_headed_attention.1} parent=5 // pred_fallthru
      _
    %p375 = scmp.le.s32.totalorder 1, %s17
    %p376 = scmp.lt.s32.totalorder %s17, 3
    %p377 = pnand %p375, %p376
    %p378 = pneg %p377
    // Predicated region
    $region61: #{multi_headed_attention.1} parent=5 // pred_check
      _
    $region62: #{multi_headed_attention.1} parent=5 // pred_check_branch
      %380 = sbr.rel (%p377) target = $region64
    $region63: #{multi_headed_attention.1} parent=5 // pred_region
      %s381 = ssub.s32 %s17, 1
      %p382 = scmp.lt.s32.totalorder %s26, 1
      %s383 = scalar_select %p382, %s26, 1
      %p384 = scmp.lt.s32.totalorder %s27, 0
      %s385 = scalar_select %p384, %s27, 0
      %s386 = smul.addr %s383, 4
      %s387 = sadd.s32 %s385, %s386
      %s388 = smul.addr %s387, 4
      %s389 = scalar_lea.vmem %s0, %s388
      %p390 = pneg %p57
      %p391 = pneg %p54
      %p392 = scmp.lt.s32.totalorder %s26, 1
      %s393 = scalar_select %p392, %s26, 1
      %s394 = smul.addr %s393, 4
      %s395 = smul.addr %s394, 4
      %s396 = scalar_lea.vmem %s1, %s395
      %p397 = pneg %p83
      %p398 = pneg %p80
      %p399 = scmp.lt.s32.totalorder %s26, 1
      %s400 = scalar_select %p399, %s26, 1
      %s401 = smul.addr %s400, 4
      %s402 = smul.addr %s401, 4
      %s403 = scalar_lea.vmem %s2, %s402
      %p404 = pneg %p109
      %p405 = pneg %p106
      %p406 = pneg %p130
      %p407 = pneg %p127
      %p408 = pneg %p151
      %p409 = pneg %p148
      %p410 = pneg %p172
      %p411 = pneg %p169
      %p412 = pneg %p193
      %p413 = pneg %p190
      %p414 = pneg %p214
      %p415 = pneg %p211
      %p416 = pneg %p235
      %p417 = pneg %p232
      %p418 = pneg %p256
      %p419 = pneg %p253
      %p420 = pneg %p277
      %p421 = pneg %p274
      %p422 = pneg %p305
      %p423 = pneg %p302
      %p424 = scmp.lt.s32.totalorder %s26, 1
      %s425 = scalar_select %p424, %s26, 1
      %p426 = scmp.lt.s32.totalorder %s27, 0
      %s427 = scalar_select %p426, %s27, 0
      %s428 = smul.addr %s425, 4
      %s429 = sadd.s32 %s427, %s428
      %s430 = smul.addr %s429, 8
      %s431 = scalar_lea.vmem %s11, %s430
      %p432 = scmp.lt.s32.totalorder %s26, 1
      %s433 = scalar_select %p432, %s26, 1
      %p434 = scmp.lt.s32.totalorder %s27, 0
      %s435 = scalar_select %p434, %s27, 0
      %s436 = smul.addr %s433, 4
      %s437 = sadd.s32 %s435, %s436
      %s438 = smul.addr %s437, 4
      %s439 = scalar_lea.vmem %s0, %s438
      %p440 = scmp.lt.s32.totalorder %s26, 1
      %s441 = scalar_select %p440, %s26, 1
      %s442 = smul.addr %s441, 4
      %s443 = smul.addr %s442, 4
      %s444 = scalar_lea.vmem %s1, %s443
      %p445 = scmp.lt.s32.totalorder %s26, 1
      %s446 = scalar_select %p445, %s26, 1
      %s447 = smul.addr %s446, 4
      %s448 = smul.addr %s447, 4
      %s449 = scalar_lea.vmem %s2, %s448
      %p450 = scmp.lt.s32.totalorder %s26, 1
      %s451 = scalar_select %p450, %s26, 1
      %p452 = scmp.lt.s32.totalorder %s27, 0
      %s453 = scalar_select %p452, %s27, 0
      %s454 = smul.addr %s451, 4
      %s455 = sadd.s32 %s453, %s454
      %s456 = smul.addr %s455, 8
      %s457 = scalar_lea.vmem %s11, %s456
      %v459 = vld [vmem:[%s3] sm:$0xf]
      %v460 = vld [vmem:[%s3 + $0x4] sm:$0xf]
      %v461 = vld [vmem:[%s3 + $0x8] sm:$0xf]
      %v462 = vld [vmem:[%s3 + $0xc] sm:$0xf]
      %v463 = vld [vmem:[%s5] sm:$0xf]
      %v464 = vld [vmem:[%s5 + $0x4] sm:$0xf]
      %v465 = vld [vmem:[%s5 + $0x8] sm:$0xf]
      %v466 = vld [vmem:[%s5 + $0xc] sm:$0xf]
      %v467 = vld [vmem:[%s7] sm:$0xf]
      %v468 = vld [vmem:[%s7 + $0x4] sm:$0xf]
      %v469 = vld [vmem:[%s7 + $0x8] sm:$0xf]
      %v470 = vld [vmem:[%s7 + $0xc] sm:$0xf]
      %v471 = vld [vmem:[%s9] sm:$0xf]
      %v472 = vld [vmem:[%s9 + $0x4] sm:$0xf]
      %v473 = vld [vmem:[%s9 + $0x8] sm:$0xf]
      %v474 = vld [vmem:[%s9 + $0xc] sm:$0xf]
      %v475 = vld [vmem:[%s4] sm:$0xff]
      %v476 = vld [vmem:[%s4 + $0x8] sm:$0xff]
      %v477 = vld [vmem:[%s4 + $0x10] sm:$0xff]
      %v478 = vld [vmem:[%s4 + $0x18] sm:$0xff]
      %v479 = vld [vmem:[%s6] sm:$0xff]
      %v480 = vld [vmem:[%s6 + $0x8] sm:$0xff]
      %v481 = vld [vmem:[%s6 + $0x10] sm:$0xff]
      %v482 = vld [vmem:[%s6 + $0x18] sm:$0xff]
      %v483 = vld [vmem:[%s8] sm:$0xff]
      %v484 = vld [vmem:[%s8 + $0x8] sm:$0xff]
      %v485 = vld [vmem:[%s8 + $0x10] sm:$0xff]
      %v486 = vld [vmem:[%s8 + $0x18] sm:$0xff]
      %v487 = vld [vmem:[%s10] sm:$0xff]
      %v488 = vld [vmem:[%s10 + $0x8] sm:$0xff]
      %v489 = vld [vmem:[%s10 + $0x10] sm:$0xff]
      %v490 = vld [vmem:[%s10 + $0x18] sm:$0xff]
      %v491 = vlaneseq
      %v492 = vshrl.u32 %v491, 7
      %v493 = vadd.s32 %v492, 8
      %v494 = vadd.s32 %v492, 16
      %v495 = vadd.s32 %v492, 24
      %vm496 = vcmp.lt.s32.totalorder %v492, 0
      %v497 = vsub.s32 0, %v492
      %v498 = vsel %vm496, %v497, %v492
      %v499 = vshrl.u32 %v498, 2
      %v500 = vand.u32 %v498, 3
      %v501 = vsub.s32 0, %v500
      %v502 = vsel %vm496, %v501, %v500
      %vm503 = vcmp.lt.s32.totalorder %v493, 0
      %v504 = vsub.s32 0, %v493
      %v505 = vsel %vm503, %v504, %v493
      %v506 = vshrl.u32 %v505, 2
      %v507 = vand.u32 %v505, 3
      %v508 = vsub.s32 0, %v507
      %v509 = vsel %vm503, %v508, %v507
      %vm510 = vcmp.lt.s32.totalorder %v494, 0
      %v511 = vsub.s32 0, %v494
      %v512 = vsel %vm510, %v511, %v494
      %v513 = vshrl.u32 %v512, 2
      %v514 = vand.u32 %v512, 3
      %v515 = vsub.s32 0, %v514
      %v516 = vsel %vm510, %v515, %v514
      %vm517 = vcmp.lt.s32.totalorder %v495, 0
      %v518 = vsub.s32 0, %v495
      %v519 = vsel %vm517, %v518, %v495
      %v520 = vshrl.u32 %v519, 2
      %v521 = vand.u32 %v519, 3
      %v522 = vsub.s32 0, %v521
      %v523 = vsel %vm517, %v522, %v521
      %vm524 = vcmp.ne.s32.totalorder %v502, 0
      %vm525 = vcmp.ne.s32.totalorder %v509, 0
      %vm526 = vcmp.ne.s32.totalorder %v516, 0
      %vm527 = vcmp.ne.s32.totalorder %v523, 0
      %vm528 = vcmp.lt.s32.totalorder %v502, 0
      %vm529 = vcmp.lt.s32.totalorder %v509, 0
      %vm530 = vcmp.lt.s32.totalorder %v516, 0
      %vm531 = vcmp.lt.s32.totalorder %v523, 0
      %vm532 = vmand %vm528, %vm524
      %vm533 = vmand %vm529, %vm525
      %vm534 = vmand %vm530, %vm526
      %vm535 = vmand %vm531, %vm527
      %v536 = vadd.s32 %v502, 4
      %v537 = vadd.s32 %v509, 4
      %v538 = vadd.s32 %v516, 4
      %v539 = vadd.s32 %v523, 4
      %v540 = vsel %vm532, %v536, %v502
      %v541 = vsel %vm533, %v537, %v509
      %v542 = vsel %vm534, %v538, %v516
      %v543 = vsel %vm535, %v539, %v523
      %v544 = vlaneseq
      %v545 = vand.u32 %v544, 127
      %vm546 = vcmp.lt.s32.totalorder %v545, 0
      %v547 = vsub.s32 0, %v545
      %v548 = vsel %vm546, %v547, %v545
      %v549 = vshrl.u32 %v548, 2
      %v550 = vand.u32 %v548, 3
      %v551 = vsub.s32 0, %v550
      %v552 = vsel %vm546, %v551, %v550
      %vm553 = vcmp.ne.s32.totalorder %v552, 0
      %vm554 = vcmp.lt.s32.totalorder %v552, 0
      %vm555 = vmand %vm554, %vm553
      %v556 = vadd.s32 %v552, 4
      %v557 = vsel %vm555, %v556, %v552
      %vm558 = vcmp.eq.s32.totalorder %v540, %v557
      %vm559 = vcmp.eq.s32.totalorder %v541, %v557
      %vm560 = vcmp.eq.s32.totalorder %v542, %v557
      %vm561 = vcmp.eq.s32.totalorder %v543, %v557
      %vm562 = vcmp.lt.s32.totalorder %v545, 24
      %v563 = vld [vmem:[%s439] sm:$0xf]
      %v564 = vld [vmem:[%s439 + $0x4] sm:$0xf]
      %v565 = vld [vmem:[%s439 + $0x8] sm:$0xf]
      %v566 = vld [vmem:[%s439 + $0xc] sm:$0xf]
      %v567 = vld [vmem:[%s444] sm:$0xf]
      %v568 = vld [vmem:[%s444 + $0x4] sm:$0xf]
      %v569 = vld [vmem:[%s444 + $0x8] sm:$0xf]
      %v570 = vld [vmem:[%s444 + $0xc] sm:$0xf]
      %v571 = vld [vmem:[%s449] sm:$0xf]
      %v572 = vld [vmem:[%s449 + $0x4] sm:$0xf]
      %v573 = vld [vmem:[%s449 + $0x8] sm:$0xf]
      %v574 = vld [vmem:[%s449 + $0xc] sm:$0xf]
      %576 = vset.pattern.permute.xlu0 0
      %577 = vperm.xlu0 %576, %v475
      %v578 = vpop.permute.xlu0 %577
      %581 = vset.pattern.permute.xlu0 0
      %582 = vperm.xlu0 %581, %v476
      %v583 = vpop.permute.xlu0 %582
      %586 = vset.pattern.permute.xlu0 0
      %587 = vperm.xlu0 %586, %v477
      %v588 = vpop.permute.xlu0 %587
      %591 = vset.pattern.permute.xlu0 0
      %592 = vperm.xlu0 %591, %v478
      %v593 = vpop.permute.xlu0 %592
      %v599 = vunpack.c.l.b16 %v459
      %v600 = vunpack.c.l.b16 %v460
      %v601 = vunpack.c.l.b16 %v461
      %v602 = vunpack.c.l.b16 %v462
      %v603 = vpack.c.b16 %v600, %v599
      %v604 = vpack.c.b16 %v602, %v601
      %v609 = vunpack.c.l.b16 %v563
      %v610 = vunpack.c.l.b16 %v564
      %v611 = vunpack.c.l.b16 %v565
      %v612 = vunpack.c.l.b16 %v566
      %v613 = vpack.c.b16 %v610, %v609
      %v614 = vpack.c.b16 %v612, %v611
      %vm617 = vcmask 261120
      %v619 = vsel %vm617, %v603, 0
      %v622 = vsel %vm617, %v604, 0
      %624 = vmatprep.subr.bf16.mxu0 0
      %625 = vmatpush1.bf16.msra.mxu0 0
      %626 = vmatprep.subr.bf16.mxu0 0
      %627 = vmatpush1.bf16.msra.mxu0 0
      %628 = vmatprep.subr.bf16.mxu0 0
      %629 = vmatpush1.bf16.msra.mxu0 0
      %630 = vmatprep.subr.bf16.mxu0 0
      %631 = vmatpush1.bf16.msra.mxu0 0
      %632 = vmatprep.subr.bf16.mxu0 0
      %633 = vmatpush1.bf16.msra.mxu0 0
      %634 = vmatprep.subr.bf16.mxu0 0
      %635 = vmatpush1.bf16.msra.mxu0 0
      %636 = vmatprep.subr.bf16.mxu0 0
      %637 = vmatpush1.bf16.msra.mxu0 %v614
      %638 = vmatprep.subr.bf16.mxu0 0
      %639 = vmatpush1.bf16.msra.mxu0 %v613
      %640 = vmatprep.subr.bf16.mxu0 0
      %641 = vmatpush2.bf16.msra.mxu0 0
      %642 = vmatprep.subr.bf16.mxu0 0
      %643 = vmatpush2.bf16.msra.mxu0 0
      %644 = vmatprep.subr.bf16.mxu0 0
      %645 = vmatpush2.bf16.msra.mxu0 0
      %646 = vmatprep.subr.bf16.mxu0 0
      %647 = vmatpush2.bf16.msra.mxu0 0
      %648 = vmatprep.subr.bf16.mxu0 0
      %649 = vmatpush2.bf16.msra.mxu0 0
      %650 = vmatprep.subr.bf16.mxu0 0
      %651 = vmatpush2.bf16.msra.mxu0 0
      %652 = vmatprep.subr.bf16.mxu0 0
      %653 = vmatpush2.bf16.msra.mxu0 0
      %654 = vmatprep.subr.bf16.mxu0 0
      %655 = vmatpush2.bf16.msra.mxu0 0
      %656 = vmatprep.mubr.bf16.mxu0 0
      %657 = vmatmul.mubr.bf16.gmra.mxu0 %v619
      %v658 = vpop.f32.mrf.mxu0
      %v659 = vadd.f32 %v578, %v658
      %v660 = vpop.f32.mrf.mxu0
      %v661 = vpop.f32.mrf.mxu0
      %v662 = vadd.f32 %v583, %v661
      %v663 = vpop.f32.mrf.mxu0
      %664 = vmatprep.mubr.bf16.mxu0 0
      %665 = vmatmul.mubr.bf16.gmra.mxu0 %v622
      %v666 = vpop.f32.mrf.mxu0
      %v667 = vadd.f32 %v588, %v666
      %v668 = vpop.f32.mrf.mxu0
      %v669 = vpop.f32.mrf.mxu0
      %v670 = vadd.f32 %v593, %v669
      %v671 = vpop.f32.mrf.mxu0
      %672 = vdwg.mxu0
      %674 = vset.pattern.permute.xlu0 0
      %675 = vperm.xlu0 %674, %v479
      %v676 = vpop.permute.xlu0 %675
      %679 = vset.pattern.permute.xlu0 0
      %680 = vperm.xlu0 %679, %v480
      %v681 = vpop.permute.xlu0 %680
      %684 = vset.pattern.permute.xlu0 0
      %685 = vperm.xlu0 %684, %v481
      %v686 = vpop.permute.xlu0 %685
      %689 = vset.pattern.permute.xlu0 0
      %690 = vperm.xlu0 %689, %v482
      %v691 = vpop.permute.xlu0 %690
      %v697 = vunpack.c.l.b16 %v463
      %v698 = vunpack.c.l.b16 %v464
      %v699 = vunpack.c.l.b16 %v465
      %v700 = vunpack.c.l.b16 %v466
      %v701 = vpack.c.b16 %v698, %v697
      %v702 = vpack.c.b16 %v700, %v699
      %v707 = vunpack.c.l.b16 %v567
      %v708 = vunpack.c.l.b16 %v568
      %v709 = vunpack.c.l.b16 %v569
      %v710 = vunpack.c.l.b16 %v570
      %v711 = vpack.c.b16 %v708, %v707
      %v712 = vpack.c.b16 %v710, %v709
      %v716 = vsel %vm617, %v701, 0
      %v719 = vsel %vm617, %v702, 0
      %721 = vmatprep.subr.bf16.mxu0 0
      %722 = vmatpush1.bf16.msra.mxu0 0
      %723 = vmatprep.subr.bf16.mxu0 0
      %724 = vmatpush1.bf16.msra.mxu0 0
      %725 = vmatprep.subr.bf16.mxu0 0
      %726 = vmatpush1.bf16.msra.mxu0 0
      %727 = vmatprep.subr.bf16.mxu0 0
      %728 = vmatpush1.bf16.msra.mxu0 0
      %729 = vmatprep.subr.bf16.mxu0 0
      %730 = vmatpush1.bf16.msra.mxu0 0
      %731 = vmatprep.subr.bf16.mxu0 0
      %732 = vmatpush1.bf16.msra.mxu0 0
      %733 = vmatprep.subr.bf16.mxu0 0
      %734 = vmatpush1.bf16.msra.mxu0 %v712
      %735 = vmatprep.subr.bf16.mxu0 0
      %736 = vmatpush1.bf16.msra.mxu0 %v711
      %737 = vmatprep.subr.bf16.mxu0 0
      %738 = vmatpush2.bf16.msra.mxu0 0
      %739 = vmatprep.subr.bf16.mxu0 0
      %740 = vmatpush2.bf16.msra.mxu0 0
      %741 = vmatprep.subr.bf16.mxu0 0
      %742 = vmatpush2.bf16.msra.mxu0 0
      %743 = vmatprep.subr.bf16.mxu0 0
      %744 = vmatpush2.bf16.msra.mxu0 0
      %745 = vmatprep.subr.bf16.mxu0 0
      %746 = vmatpush2.bf16.msra.mxu0 0
      %747 = vmatprep.subr.bf16.mxu0 0
      %748 = vmatpush2.bf16.msra.mxu0 0
      %749 = vmatprep.subr.bf16.mxu0 0
      %750 = vmatpush2.bf16.msra.mxu0 0
      %751 = vmatprep.subr.bf16.mxu0 0
      %752 = vmatpush2.bf16.msra.mxu0 0
      %753 = vmatprep.mubr.bf16.mxu0 0
      %754 = vmatmul.mubr.bf16.gmra.mxu0 %v716
      %v755 = vpop.f32.mrf.mxu0
      %v756 = vadd.f32 %v676, %v755
      %v757 = vpop.f32.mrf.mxu0
      %v758 = vpop.f32.mrf.mxu0
      %v759 = vadd.f32 %v681, %v758
      %v760 = vpop.f32.mrf.mxu0
      %761 = vmatprep.mubr.bf16.mxu0 0
      %762 = vmatmul.mubr.bf16.gmra.mxu0 %v719
      %v763 = vpop.f32.mrf.mxu0
      %v764 = vadd.f32 %v686, %v763
      %v765 = vpop.f32.mrf.mxu0
      %v766 = vpop.f32.mrf.mxu0
      %v767 = vadd.f32 %v691, %v766
      %v768 = vpop.f32.mrf.mxu0
      %769 = vdwg.mxu0
      %771 = vset.pattern.permute.xlu0 0
      %772 = vperm.xlu0 %771, %v483
      %v773 = vpop.permute.xlu0 %772
      %776 = vset.pattern.permute.xlu0 0
      %777 = vperm.xlu0 %776, %v484
      %v778 = vpop.permute.xlu0 %777
      %781 = vset.pattern.permute.xlu0 0
      %782 = vperm.xlu0 %781, %v485
      %v783 = vpop.permute.xlu0 %782
      %786 = vset.pattern.permute.xlu0 0
      %787 = vperm.xlu0 %786, %v486
      %v788 = vpop.permute.xlu0 %787
      %v794 = vunpack.c.l.b16 %v467
      %v795 = vunpack.c.l.b16 %v468
      %v796 = vunpack.c.l.b16 %v469
      %v797 = vunpack.c.l.b16 %v470
      %v798 = vpack.c.b16 %v795, %v794
      %v799 = vpack.c.b16 %v797, %v796
      %v804 = vunpack.c.l.b16 %v571
      %v805 = vunpack.c.l.b16 %v572
      %v806 = vunpack.c.l.b16 %v573
      %v807 = vunpack.c.l.b16 %v574
      %v808 = vpack.c.b16 %v805, %v804
      %v809 = vpack.c.b16 %v807, %v806
      %v813 = vsel %vm617, %v798, 0
      %v816 = vsel %vm617, %v799, 0
      %818 = vmatprep.subr.bf16.mxu0 0
      %819 = vmatpush1.bf16.msra.mxu0 0
      %820 = vmatprep.subr.bf16.mxu0 0
      %821 = vmatpush1.bf16.msra.mxu0 0
      %822 = vmatprep.subr.bf16.mxu0 0
      %823 = vmatpush1.bf16.msra.mxu0 0
      %824 = vmatprep.subr.bf16.mxu0 0
      %825 = vmatpush1.bf16.msra.mxu0 0
      %826 = vmatprep.subr.bf16.mxu0 0
      %827 = vmatpush1.bf16.msra.mxu0 0
      %828 = vmatprep.subr.bf16.mxu0 0
      %829 = vmatpush1.bf16.msra.mxu0 0
      %830 = vmatprep.subr.bf16.mxu0 0
      %831 = vmatpush1.bf16.msra.mxu0 %v809
      %832 = vmatprep.subr.bf16.mxu0 0
      %833 = vmatpush1.bf16.msra.mxu0 %v808
      %834 = vmatprep.subr.bf16.mxu0 0
      %835 = vmatpush2.bf16.msra.mxu0 0
      %836 = vmatprep.subr.bf16.mxu0 0
      %837 = vmatpush2.bf16.msra.mxu0 0
      %838 = vmatprep.subr.bf16.mxu0 0
      %839 = vmatpush2.bf16.msra.mxu0 0
      %840 = vmatprep.subr.bf16.mxu0 0
      %841 = vmatpush2.bf16.msra.mxu0 0
      %842 = vmatprep.subr.bf16.mxu0 0
      %843 = vmatpush2.bf16.msra.mxu0 0
      %844 = vmatprep.subr.bf16.mxu0 0
      %845 = vmatpush2.bf16.msra.mxu0 0
      %846 = vmatprep.subr.bf16.mxu0 0
      %847 = vmatpush2.bf16.msra.mxu0 0
      %848 = vmatprep.subr.bf16.mxu0 0
      %849 = vmatpush2.bf16.msra.mxu0 0
      %850 = vmatprep.mubr.bf16.mxu0 0
      %851 = vmatmul.mubr.bf16.gmra.mxu0 %v813
      %v852 = vpop.f32.mrf.mxu0
      %v853 = vadd.f32 %v773, %v852
      %v854 = vpop.f32.mrf.mxu0
      %v855 = vpop.f32.mrf.mxu0
      %v856 = vadd.f32 %v778, %v855
      %v857 = vpop.f32.mrf.mxu0
      %858 = vmatprep.mubr.bf16.mxu0 0
      %859 = vmatmul.mubr.bf16.gmra.mxu0 %v816
      %v860 = vpop.f32.mrf.mxu0
      %v861 = vadd.f32 %v783, %v860
      %v862 = vpop.f32.mrf.mxu0
      %v863 = vpop.f32.mrf.mxu0
      %v864 = vadd.f32 %v788, %v863
      %v865 = vpop.f32.mrf.mxu0
      %866 = vdwg.mxu0
      %vm867 = vcmp.gt.f32.partialorder %v659, 0.0
      %vm868 = vcmp.gt.f32.partialorder %v662, 0.0
      %vm869 = vcmp.gt.f32.partialorder %v667, 0.0
      %vm870 = vcmp.gt.f32.partialorder %v670, 0.0
      %v871 = vadd.f32 %v659, 1.0
      %v872 = vadd.f32 %v662, 1.0
      %v873 = vadd.f32 %v667, 1.0
      %v874 = vadd.f32 %v670, 1.0
      %v875 = vmin.f32 %v659, 0.0
      %v876 = vmin.f32 %v662, 0.0
      %v877 = vmin.f32 %v667, 0.0
      %v878 = vmin.f32 %v670, 0.0
      %v879 = vmul.f32 %v875, 1.442695
      %v880 = vpow.pop %v879
      %v881 = vmul.f32 %v876, 1.442695
      %v882 = vpow.pop %v881
      %v883 = vmul.f32 %v877, 1.442695
      %v884 = vpow.pop %v883
      %v885 = vmul.f32 %v878, 1.442695
      %v886 = vpow.pop %v885
      %v887 = vsel %vm867, %v871, %v880
      %v888 = vsel %vm868, %v872, %v882
      %v889 = vsel %vm869, %v873, %v884
      %v890 = vsel %vm870, %v874, %v886
      %vm891 = vcmp.gt.f32.partialorder %v756, 0.0
      %vm892 = vcmp.gt.f32.partialorder %v759, 0.0
      %vm893 = vcmp.gt.f32.partialorder %v764, 0.0
      %vm894 = vcmp.gt.f32.partialorder %v767, 0.0
      %v895 = vadd.f32 %v756, 1.0
      %v896 = vadd.f32 %v759, 1.0
      %v897 = vadd.f32 %v764, 1.0
      %v898 = vadd.f32 %v767, 1.0
      %v899 = vmin.f32 %v756, 0.0
      %v900 = vmin.f32 %v759, 0.0
      %v901 = vmin.f32 %v764, 0.0
      %v902 = vmin.f32 %v767, 0.0
      %v903 = vmul.f32 %v899, 1.442695
      %v904 = vpow.pop %v903
      %v905 = vmul.f32 %v900, 1.442695
      %v906 = vpow.pop %v905
      %v907 = vmul.f32 %v901, 1.442695
      %v908 = vpow.pop %v907
      %v909 = vmul.f32 %v902, 1.442695
      %v910 = vpow.pop %v909
      %v911 = vsel %vm891, %v895, %v904
      %v912 = vsel %vm892, %v896, %v906
      %v913 = vsel %vm893, %v897, %v908
      %v914 = vsel %vm894, %v898, %v910
      %v915 = vsel %vm562, %v911, 0.0
      %v916 = vsel %vm562, %v912, 0.0
      %v917 = vsel %vm562, %v913, 0.0
      %v918 = vsel %vm562, %v914, 0.0
      %v919 = vpack.c.bf16 %v856, %v853
      %v920 = vpack.c.bf16 %v864, %v861
      %v921 = vpack.c.bf16 %v916, %v915
      %v922 = vpack.c.bf16 %v918, %v917
      %923 = vmatprep.subr.bf16.mxu0 0
      %924 = vmatpush1.bf16.xpose.msra.mxu0 0
      %925 = vmatprep.subr.bf16.mxu0 0
      %926 = vmatpush1.bf16.xpose.msra.mxu0 0
      %927 = vmatprep.subr.bf16.mxu0 0
      %928 = vmatpush1.bf16.xpose.msra.mxu0 0
      %929 = vmatprep.subr.bf16.mxu0 0
      %930 = vmatpush1.bf16.xpose.msra.mxu0 0
      %931 = vmatprep.subr.bf16.mxu0 0
      %932 = vmatpush1.bf16.xpose.msra.mxu0 0
      %933 = vmatprep.subr.bf16.mxu0 0
      %934 = vmatpush1.bf16.xpose.msra.mxu0 0
      %935 = vmatprep.subr.bf16.mxu0 0
      %936 = vmatpush1.bf16.xpose.msra.mxu0 %v922
      %937 = vmatprep.subr.bf16.mxu0 0
      %938 = vmatpush1.bf16.xpose.msra.mxu0 %v921
      %939 = vmatprep.subr.bf16.mxu0 0
      %940 = vmatpush2.bf16.xpose.msra.mxu0 0
      %941 = vmatprep.subr.bf16.mxu0 0
      %942 = vmatpush2.bf16.xpose.msra.mxu0 0
      %943 = vmatprep.subr.bf16.mxu0 0
      %944 = vmatpush2.bf16.xpose.msra.mxu0 0
      %945 = vmatprep.subr.bf16.mxu0 0
      %946 = vmatpush2.bf16.xpose.msra.mxu0 0
      %947 = vmatprep.subr.bf16.mxu0 0
      %948 = vmatpush2.bf16.xpose.msra.mxu0 0
      %949 = vmatprep.subr.bf16.mxu0 0
      %950 = vmatpush2.bf16.xpose.msra.mxu0 0
      %951 = vmatprep.subr.bf16.mxu0 0
      %952 = vmatpush2.bf16.xpose.msra.mxu0 0
      %953 = vmatprep.subr.bf16.mxu0 0
      %954 = vmatpush2.bf16.xpose.msra.mxu0 0
      %955 = vmatprep.mubr.bf16.mxu0 0
      %956 = vmatmul.mubr.bf16.gmra.mxu0 %v919
      %v957 = vpop.f32.mrf.mxu0
      %v958 = vadd.f32 0.0, %v957
      %v959 = vpop.f32.mrf.mxu0
      %v960 = vpop.f32.mrf.mxu0
      %v961 = vadd.f32 0.0, %v960
      %v962 = vpop.f32.mrf.mxu0
      %963 = vmatprep.mubr.bf16.mxu0 0
      %964 = vmatmul.mubr.bf16.gmra.mxu0 %v920
      %v965 = vpop.f32.mrf.mxu0
      %v966 = vadd.f32 0.0, %v965
      %v967 = vpop.f32.mrf.mxu0
      %v968 = vpop.f32.mrf.mxu0
      %v969 = vadd.f32 0.0, %v968
      %v970 = vpop.f32.mrf.mxu0
      %971 = vdwg.mxu0
      %v972 = vsel %vm558, %v958, 0.0
      %v973 = vsel %vm559, %v961, 0.0
      %v974 = vsel %vm560, %v966, 0.0
      %v975 = vsel %vm561, %v969, 0.0
      %976 = vadd.xlane.f32.xlu0 %v915
      %v977 = vpop.xlane.xlu0 %976
      %978 = vadd.xlane.f32.xlu0 %v916
      %v979 = vpop.xlane.xlu0 %978
      %980 = vadd.xlane.f32.xlu0 %v917
      %v981 = vpop.xlane.xlu0 %980
      %982 = vadd.xlane.f32.xlu0 %v918
      %v983 = vpop.xlane.xlu0 %982
      %v984 = vmul.f32 %v977, %v887
      %v985 = vmul.f32 %v979, %v888
      %v986 = vmul.f32 %v981, %v889
      %v987 = vmul.f32 %v983, %v890
      %v988 = vrot.slane %v984, 4
      %v989 = vrot.slane %v985, 4
      %v990 = vrot.slane %v986, 4
      %v991 = vrot.slane %v987, 4
      %vm992 = vcmp.lt.s32.totalorder %v492, 4
      %v993 = vsel %vm992, %v990, %v991
      %v994 = vsel %vm992, %v989, %v990
      %v995 = vsel %vm992, %v988, %v989
      %v996 = vsel %vm992, %v991, %v988
      %v997 = vadd.f32 %v984, %v996
      %v998 = vadd.f32 %v985, %v995
      %v999 = vadd.f32 %v986, %v994
      %v1000 = vadd.f32 %v987, %v993
      %v1001 = vadd.f32 %v997, %v1000
      %v1002 = vadd.f32 %v998, %v997
      %v1003 = vadd.f32 %v999, %v998
      %v1004 = vadd.f32 %v1000, %v999
      %v1005 = vadd.f32 %v1001, %v1003
      %v1006 = vadd.f32 %v1002, %v1004
      %v1007 = vadd.f32 %v1005, 1e-06
      %v1008 = vadd.f32 %v1006, 1e-06
      %v1009 = vrcp.pop %v1007
      %v1010 = vrcp.pop %v1008
      %v1011 = vpack.c.bf16 %v973, %v972
      %v1012 = vpack.c.bf16 %v975, %v974
      %v1013 = vpack.c.bf16 %v888, %v887
      %v1014 = vpack.c.bf16 %v890, %v889
      %v1016 = vsel %vm617, %v1011, 0
      %v1019 = vsel %vm617, %v1012, 0
      %1021 = vmatprep.subr.bf16.mxu0 0
      %1022 = vmatpush1.bf16.msra.mxu0 0
      %1023 = vmatprep.subr.bf16.mxu0 0
      %1024 = vmatpush1.bf16.msra.mxu0 0
      %1025 = vmatprep.subr.bf16.mxu0 0
      %1026 = vmatpush1.bf16.msra.mxu0 0
      %1027 = vmatprep.subr.bf16.mxu0 0
      %1028 = vmatpush1.bf16.msra.mxu0 0
      %1029 = vmatprep.subr.bf16.mxu0 0
      %1030 = vmatpush1.bf16.msra.mxu0 0
      %1031 = vmatprep.subr.bf16.mxu0 0
      %1032 = vmatpush1.bf16.msra.mxu0 0
      %1033 = vmatprep.subr.bf16.mxu0 0
      %1034 = vmatpush1.bf16.msra.mxu0 %v1014
      %1035 = vmatprep.subr.bf16.mxu0 0
      %1036 = vmatpush1.bf16.msra.mxu0 %v1013
      %1037 = vmatprep.subr.bf16.mxu0 0
      %1038 = vmatpush2.bf16.msra.mxu0 0
      %1039 = vmatprep.subr.bf16.mxu0 0
      %1040 = vmatpush2.bf16.msra.mxu0 0
      %1041 = vmatprep.subr.bf16.mxu0 0
      %1042 = vmatpush2.bf16.msra.mxu0 0
      %1043 = vmatprep.subr.bf16.mxu0 0
      %1044 = vmatpush2.bf16.msra.mxu0 0
      %1045 = vmatprep.subr.bf16.mxu0 0
      %1046 = vmatpush2.bf16.msra.mxu0 0
      %1047 = vmatprep.subr.bf16.mxu0 0
      %1048 = vmatpush2.bf16.msra.mxu0 0
      %1049 = vmatprep.subr.bf16.mxu0 0
      %1050 = vmatpush2.bf16.msra.mxu0 0
      %1051 = vmatprep.subr.bf16.mxu0 0
      %1052 = vmatpush2.bf16.msra.mxu0 0
      %1053 = vmatprep.mubr.bf16.mxu0 0
      %1054 = vmatmul.mubr.bf16.gmra.mxu0 %v1016
      %v1055 = vpop.f32.mrf.mxu0
      %v1056 = vadd.f32 0.0, %v1055
      %v1057 = vpop.f32.mrf.mxu0
      %v1058 = vpop.f32.mrf.mxu0
      %v1059 = vadd.f32 0.0, %v1058
      %v1060 = vpop.f32.mrf.mxu0
      %1061 = vmatprep.mubr.bf16.mxu0 0
      %1062 = vmatmul.mubr.bf16.gmra.mxu0 %v1019
      %v1063 = vpop.f32.mrf.mxu0
      %v1064 = vadd.f32 0.0, %v1063
      %v1065 = vpop.f32.mrf.mxu0
      %v1066 = vpop.f32.mrf.mxu0
      %v1067 = vadd.f32 0.0, %v1066
      %v1068 = vpop.f32.mrf.mxu0
      %1069 = vdwg.mxu0
      %v1070 = vmul.f32 %v1056, %v1009
      %v1071 = vmul.f32 %v1059, %v1010
      %v1072 = vmul.f32 %v1064, %v1009
      %v1073 = vmul.f32 %v1067, %v1010
      %v1074 = vpack.c.bf16 %v1071, %v1070
      %v1075 = vpack.c.bf16 %v1073, %v1072
      %1077 = vset.pattern.permute.xlu0 0
      %1078 = vperm.xlu0 %1077, %v487
      %v1079 = vpop.permute.xlu0 %1078
      %1082 = vset.pattern.permute.xlu0 0
      %1083 = vperm.xlu0 %1082, %v488
      %v1084 = vpop.permute.xlu0 %1083
      %1087 = vset.pattern.permute.xlu0 0
      %1088 = vperm.xlu0 %1087, %v489
      %v1089 = vpop.permute.xlu0 %1088
      %1092 = vset.pattern.permute.xlu0 0
      %1093 = vperm.xlu0 %1092, %v490
      %v1094 = vpop.permute.xlu0 %1093
      %v1100 = vunpack.c.l.b16 %v471
      %v1101 = vunpack.c.l.b16 %v472
      %v1102 = vunpack.c.l.b16 %v473
      %v1103 = vunpack.c.l.b16 %v474
      %v1104 = vpack.c.b16 %v1101, %v1100
      %v1105 = vpack.c.b16 %v1103, %v1102
      %v1107 = vsel %vm617, %v1104, 0
      %v1110 = vsel %vm617, %v1105, 0
      %1112 = vmatprep.subr.bf16.mxu0 0
      %1113 = vmatpush1.bf16.msra.mxu0 0
      %1114 = vmatprep.subr.bf16.mxu0 0
      %1115 = vmatpush1.bf16.msra.mxu0 0
      %1116 = vmatprep.subr.bf16.mxu0 0
      %1117 = vmatpush1.bf16.msra.mxu0 0
      %1118 = vmatprep.subr.bf16.mxu0 0
      %1119 = vmatpush1.bf16.msra.mxu0 0
      %1120 = vmatprep.subr.bf16.mxu0 0
      %1121 = vmatpush1.bf16.msra.mxu0 0
      %1122 = vmatprep.subr.bf16.mxu0 0
      %1123 = vmatpush1.bf16.msra.mxu0 0
      %1124 = vmatprep.subr.bf16.mxu0 0
      %1125 = vmatpush1.bf16.msra.mxu0 %v1075
      %1126 = vmatprep.subr.bf16.mxu0 0
      %1127 = vmatpush1.bf16.msra.mxu0 %v1074
      %1128 = vmatprep.subr.bf16.mxu0 0
      %1129 = vmatpush2.bf16.msra.mxu0 0
      %1130 = vmatprep.subr.bf16.mxu0 0
      %1131 = vmatpush2.bf16.msra.mxu0 0
      %1132 = vmatprep.subr.bf16.mxu0 0
      %1133 = vmatpush2.bf16.msra.mxu0 0
      %1134 = vmatprep.subr.bf16.mxu0 0
      %1135 = vmatpush2.bf16.msra.mxu0 0
      %1136 = vmatprep.subr.bf16.mxu0 0
      %1137 = vmatpush2.bf16.msra.mxu0 0
      %1138 = vmatprep.subr.bf16.mxu0 0
      %1139 = vmatpush2.bf16.msra.mxu0 0
      %1140 = vmatprep.subr.bf16.mxu0 0
      %1141 = vmatpush2.bf16.msra.mxu0 0
      %1142 = vmatprep.subr.bf16.mxu0 0
      %1143 = vmatpush2.bf16.msra.mxu0 0
      %1144 = vmatprep.mubr.bf16.mxu0 0
      %1145 = vmatmul.mubr.bf16.gmra.mxu0 %v1107
      %v1146 = vpop.f32.mrf.mxu0
      %v1147 = vadd.f32 %v1079, %v1146
      %v1148 = vpop.f32.mrf.mxu0
      %v1149 = vpop.f32.mrf.mxu0
      %v1150 = vadd.f32 %v1084, %v1149
      %v1151 = vpop.f32.mrf.mxu0
      %1152 = vmatprep.mubr.bf16.mxu0 0
      %1153 = vmatmul.mubr.bf16.gmra.mxu0 %v1110
      %v1154 = vpop.f32.mrf.mxu0
      %v1155 = vadd.f32 %v1089, %v1154
      %v1156 = vpop.f32.mrf.mxu0
      %v1157 = vpop.f32.mrf.mxu0
      %v1158 = vadd.f32 %v1094, %v1157
      %v1159 = vpop.f32.mrf.mxu0
      %1160 = vdwg.mxu0
      %1161 = vst [vmem:[%s457] sm:$0xff] %v1147
      %1162 = vst [vmem:[%s457 + $0x8] sm:$0xff] %v1150
      %1163 = vst [vmem:[%s457 + $0x10] sm:$0xff] %v1155
      %1164 = vst [vmem:[%s457 + $0x18] sm:$0xff] %v1158
      %p1165 = scmp.lt.s32.totalorder %s26, 1
      %s1166 = scalar_select %p1165, %s26, 1
      %p1167 = scmp.lt.s32.totalorder %s27, 0
      %s1168 = scalar_select %p1167, %s27, 0
      %s1169 = smul.addr %s1166, 4
      %s1170 = sadd.s32 %s1168, %s1169
      %s1171 = smul.addr %s1170, 8
      %s1172 = scalar_lea.vmem %s11, %s1171
      // Predicated region
      $region65: #{multi_headed_attention.1} parent=63 // pred_check
        %p1173 = pneg %p302
      $region66: #{multi_headed_attention.1} parent=63 // pred_check_branch
        %1175 = sbr.rel (%p1173) target = $region68
      $region67: #{multi_headed_attention.1} parent=63 // pred_region
        _
      $region68: #{multi_headed_attention.1} parent=63 // pred_fallthru
        _
    $region64: #{multi_headed_attention.1} parent=5 // pred_fallthru
      _
    %p1176 = scmp.le.s32.totalorder 2, %s17
    // Predicated region
    $region69: #{multi_headed_attention.1} parent=5 // pred_check
      %p1177 = pneg %p1176
    $region70: #{multi_headed_attention.1} parent=5 // pred_check_branch
      %1179 = sbr.rel (%p1177) target = $region72
    $region71: #{multi_headed_attention.1} parent=5 // pred_region
      %s1180 = ssub.s32 %s17, 2
      // Predicated region
      $region73: #{multi_headed_attention.1} parent=71 // pred_check
        %p1181 = pneg %p308
      $region74: #{multi_headed_attention.1} parent=71 // pred_check_branch
        %1183 = sbr.rel (%p1181) target = $region76
      $region75: #{multi_headed_attention.1} parent=71 // pred_region
        %p1184 = scmp.lt.s32.totalorder %s28, 1
        %s1185 = scalar_select %p1184, %s28, 1
        %p1186 = scmp.lt.s32.totalorder %s29, 0
        %s1187 = scalar_select %p1186, %s29, 0
        %s1188 = smul.addr %s1185, 4
        %s1189 = sadd.s32 %s1187, %s1188
        %s1190 = smul.addr %s1189, 8
        %s1191 = scalar_lea.vmem %s11, %s1190
      $region76: #{multi_headed_attention.1} parent=71 // pred_fallthru
        _
    $region72: #{multi_headed_attention.1} parent=5 // pred_fallthru
      _
  $region6: #{multi_headed_attention.1} parent=0 // loop_footer
    %s21 = sadd.s32 1, %s17
  $region7: #{multi_headed_attention.1} parent=0 // loop_footer_branch
    %16 = sbr.rel target = $region3
  $region8: #{multi_headed_attention.1} parent=0 // loop_exit
    _

</llo_original>
